<compile_context>
chip_gen: v6e
topology: v6e:2x2x1
jax: 0.10.0
libtpu: 0.0.40
codegen_flags: <defaults>
</compile_context>

<pallas_src>
import functools
import math

import jax
import jax.numpy as jnp
from jax import lax
from jax.experimental import pallas as pl
from jax.experimental.pallas import tpu as pltpu


def _round_up(n, m):
    return ((n + m - 1) // m) * m


def _target_tile():
    """MXU-matched tile: 256 on v6e/v7x (2x256x256 MXU), 128 on v4/v5."""
    try:
        kind = jax.devices()[0].device_kind.lower()
        if "v6" in kind or "v7" in kind:
            return 256
        return 128
    except Exception:
        return 256


def _vmem_limit_bytes(resident_bytes, headroom=8 << 20):
    """Footprint + headroom, capped below the chip's physical VMEM."""
    try:
        cap = int(pltpu.get_tpu_info().vmem_capacity_bytes)
    except Exception:
        cap = 128 << 20
    ceiling = int(cap * 0.8)
    return int(max(32 << 20, min(int(resident_bytes) + headroom, ceiling)))


# --------------------------------------------------------------------------
# Kernel 1: fused Q/K/V projection (per batch element, per sequence tile).
# --------------------------------------------------------------------------
def _qkv_proj_kernel(x_ref, wq_ref, bq_ref, wk_ref, bk_ref, wv_ref, bv_ref,
                     q_ref, k_ref, v_ref, *, scale):
    x = x_ref[0]                                                     # (T, Ep) bf16
    q = jnp.dot(x, wq_ref[...], preferred_element_type=jnp.float32) + bq_ref[...]
    k = jnp.dot(x, wk_ref[...], preferred_element_type=jnp.float32) + bk_ref[...]
    v = jnp.dot(x, wv_ref[...], preferred_element_type=jnp.float32) + bv_ref[...]
    q_ref[0] = (q * scale).astype(q_ref.dtype)     # fold 1/sqrt(E) into Q (T*Ep mults)
    k_ref[0] = k.astype(k_ref.dtype)
    v_ref[0] = v.astype(v_ref.dtype)


# --------------------------------------------------------------------------
# Kernel 2: flash-style attention (online softmax over key tiles) + out-proj.
# --------------------------------------------------------------------------
def _flash_attn_kernel(q_ref, k_ref, v_ref, wo_ref, bo_ref, o_ref,
                       m_sc, l_sc, acc_sc, *, seq_len, tk):
    ki = pl.program_id(2)

    @pl.when(ki == 0)
    def _():
        m_sc[...] = jnp.full(m_sc.shape, -jnp.inf, m_sc.dtype)
        l_sc[...] = jnp.zeros(l_sc.shape, l_sc.dtype)
        acc_sc[...] = jnp.zeros(acc_sc.shape, acc_sc.dtype)

    # scores = (Q/sqrt(E)) @ K^T; contract last dims -> no materialized K.T.
    s = lax.dot_general(q_ref[0], k_ref[0],
                        dimension_numbers=(((1,), (1,)), ((), ())),
                        preferred_element_type=jnp.float32)          # (TQ, TK)

    # Mask key positions beyond the true sequence length (S padding).
    kpos = ki * tk + lax.broadcasted_iota(jnp.int32, s.shape, 1)
    s = jnp.where(kpos < seq_len, s, -1e30)

    m_prev = m_sc[...]
    m_new = jnp.maximum(m_prev, jnp.max(s, axis=-1, keepdims=True))
    alpha = jnp.exp(m_prev - m_new)
    p = jnp.exp(s - m_new)
    l_sc[...] = alpha * l_sc[...] + jnp.sum(p, axis=-1, keepdims=True)
    acc_sc[...] = alpha * acc_sc[...] + jnp.dot(
        p.astype(v_ref.dtype), v_ref[0], preferred_element_type=jnp.float32)
    m_sc[...] = m_new

    @pl.when(ki == pl.num_programs(2) - 1)
    def _():
        attn = acc_sc[...] / l_sc[...]             # exact f32 normalize (off MXU path)
        y = jnp.dot(attn.astype(wo_ref.dtype), wo_ref[...],
                    preferred_element_type=jnp.float32) + bo_ref[...]
        o_ref[0] = y.astype(o_ref.dtype)


# --------------------------------------------------------------------------
# Wrapper
# --------------------------------------------------------------------------
def self_attention_pallas(x, wq, bq, wk, bk, wv, bv, wo, bo, *,
                          compute_dtype=jnp.bfloat16,
                          out_dtype=None,
                          single_buffer_weights=True):
    """x: (B, S, E). Weights are torch-style (out, in); biases are (E,)."""
    B, S, E = x.shape
    out_dtype = jnp.dtype(x.dtype) if out_dtype is None else jnp.dtype(out_dtype)
    cdt = jnp.dtype(compute_dtype)
    scale = 1.0 / math.sqrt(float(E))

    # ---- Lane-dense padding: E -> multiple of 128, S -> tile multiple. ----
    Ep = _round_up(E, 128)
    tile = _target_tile()
    T = _round_up(S, 8) if _round_up(S, 8) <= tile else tile
    Sp = _round_up(S, T)
    n_s = Sp // T

    x_p = jnp.pad(x.astype(cdt), ((0, 0), (0, Sp - S), (0, Ep - E)))

    def prep_w(w):   # torch (out, in) -> (in, out), zero-padded, compute dtype
        return jnp.pad(w.T.astype(cdt), ((0, Ep - E), (0, Ep - E)))

    def prep_b(b):   # f32 bias, zero-padded, row vector for f32 accum adds
        return jnp.pad(b.astype(jnp.float32), (0, Ep - E)).reshape(1, Ep)

    wq_p, wk_p, wv_p, wo_p = map(prep_w, (wq, wk, wv, wo))
    bq_p, bk_p, bv_p, bo_p = map(prep_b, (bq, bk, bv, bo))

    # Weight/bias block indices never change across the grid -> single buffer.
    wmode = pl.Buffered(1) if single_buffer_weights else None
    n_wbuf = 1 if single_buffer_weights else 2
    w_bytes = Ep * Ep * cdt.itemsize + Ep * 4

    # ------------------------- Kernel 1: QKV projection -------------------
    w_spec2 = pl.BlockSpec((Ep, Ep), lambda b, s: (0, 0), pipeline_mode=wmode)
    b_spec2 = pl.BlockSpec((1, Ep), lambda b, s: (0, 0), pipeline_mode=wmode)
    seq_spec = pl.BlockSpec((1, T, Ep), lambda b, s: (b, s, 0))

    proj_resident = (2 * 4 * T * Ep * cdt.itemsize          # x + q,k,v (double-buffered)
                     + n_wbuf * 3 * w_bytes)
    qkv_shape = jax.ShapeDtypeStruct((B, Sp, Ep), cdt)

    q_s, k_s, v_s = pl.pallas_call(
        functools.partial(_qkv_proj_kernel, scale=scale),
        out_shape=(qkv_shape, qkv_shape, qkv_shape),
        grid_spec=pltpu.PrefetchScalarGridSpec(
            num_scalar_prefetch=0,
            grid=(B, n_s),
            in_specs=[seq_spec,
                      w_spec2, b_spec2,     # query proj
                      w_spec2, b_spec2,     # key proj
                      w_spec2, b_spec2],    # value proj
            out_specs=[seq_spec, seq_spec, seq_spec],
        ),
        compiler_params=pltpu.CompilerParams(
            dimension_semantics=("parallel", "parallel"),
            vmem_limit_bytes=_vmem_limit_bytes(proj_resident)),
        cost_estimate=pl.CostEstimate(
            flops=int(6 * B * Sp * Ep * Ep),
            transcendentals=0,
            bytes_accessed=int(4 * B * Sp * Ep * cdt.itemsize
                               + 3 * Ep * Ep * cdt.itemsize)),
    )(x_p, wq_p, bq_p, wk_p, bk_p, wv_p, bv_p)

    # ---------------- Kernel 2: flash attention + output projection -------
    q_spec = pl.BlockSpec((1, T, Ep), lambda b, qi, ki: (b, qi, 0))
    kv_spec = pl.BlockSpec((1, T, Ep), lambda b, qi, ki: (b, ki, 0))
    o_spec = pl.BlockSpec((1, T, Ep), lambda b, qi, ki: (b, qi, 0))
    w_spec3 = pl.BlockSpec((Ep, Ep), lambda b, qi, ki: (0, 0), pipeline_mode=wmode)
    b_spec3 = pl.BlockSpec((1, Ep), lambda b, qi, ki: (0, 0), pipeline_mode=wmode)

    attn_resident = (2 * T * Ep * cdt.itemsize               # q (double-buffered)
                     + 2 * 2 * T * Ep * cdt.itemsize         # k, v
                     + 2 * T * Ep * out_dtype.itemsize       # out
                     + n_wbuf * w_bytes                      # wo, bo
                     + (T * Ep + 2 * T) * 4)                 # m/l/acc scratch

    out_p = pl.pallas_call(
        functools.partial(_flash_attn_kernel, seq_len=S, tk=T),
        out_shape=jax.ShapeDtypeStruct((B, Sp, Ep), out_dtype),
        grid_spec=pltpu.PrefetchScalarGridSpec(
            num_scalar_prefetch=0,
            grid=(B, n_s, n_s),
            in_specs=[q_spec, kv_spec, kv_spec, w_spec3, b_spec3],
            out_specs=o_spec,
            scratch_shapes=[pltpu.VMEM((T, 1), jnp.float32),    # running max m
                            pltpu.VMEM((T, 1), jnp.float32),    # running sum l
                            pltpu.VMEM((T, Ep), jnp.float32)],  # accumulator
        ),
        compiler_params=pltpu.CompilerParams(
            dimension_semantics=("parallel", "parallel", "arbitrary"),
            vmem_limit_bytes=_vmem_limit_bytes(attn_resident)),
        cost_estimate=pl.CostEstimate(
            flops=int(B * (4 * Sp * Sp * Ep + 2 * Sp * Ep * Ep)),
            transcendentals=int(B * Sp * Sp),
            bytes_accessed=int(3 * B * Sp * Ep * cdt.itemsize
                               + Ep * Ep * cdt.itemsize
                               + B * Sp * Ep * out_dtype.itemsize)),
    )(q_s, k_s, v_s, wo_p, bo_p)

    # Strip sequence / embedding padding.
    return out_p[:, :S, :E]


def self_attention_reference(x, wq, bq, wk, bk, wv, bv, wo, bo):
    """Pure-JAX f32 reference mirroring the PyTorch module exactly."""
    E = x.shape[-1]
    q = x @ wq.T + bq
    k = x @ wk.T + bk
    v = x @ wv.T + bv
    scores = jnp.einsum("bqe,bke->bqk", q, k) / math.sqrt(float(E))
    weights = jax.nn.softmax(scores, axis=-1)
    out = jnp.einsum("bqk,bke->bqe", weights, v)
    return out @ wo.T + bo


if __name__ == "__main__":
    B, S, E = 2, 8, 32  # batch, seq_len, embedding_dim

    key = jax.random.PRNGKey(0)
    keys = jax.random.split(key, 9)

    x = jax.random.normal(keys[0], (B, S, E), dtype=jnp.float32)

    # Deterministic parameter init (torch.nn.Linear shapes: W (out,in), b (out,))
    bound = 1.0 / math.sqrt(E)

    def init_w(k):
        return jax.random.uniform(k, (E, E), jnp.float32, -bound, bound)

    def init_b(k):
        return jax.random.uniform(k, (E,), jnp.float32, -bound, bound)

    wq, bq = init_w(keys[1]), init_b(keys[2])
    wk, bk = init_w(keys[3]), init_b(keys[4])
    wv, bv = init_w(keys[5]), init_b(keys[6])
    wo, bo = init_w(keys[7]), init_b(keys[8])

    try:
        out = jax.block_until_ready(
            self_attention_pallas(x, wq, bq, wk, bk, wv, bv, wo, bo,
                                  single_buffer_weights=True))
    except Exception:
        # Fallback if pipeline_mode=pl.Buffered(1) is rejected by this
        # jax/Mosaic version for a top-level pallas_call BlockSpec.
        out = jax.block_until_ready(
            self_attention_pallas(x, wq, bq, wk, bk, wv, bv, wo, bo,
                                  single_buffer_weights=False))

    ref = self_attention_reference(x, wq, bq, wk, bk, wv, bv, wo, bo)
    assert out.shape == (B, S, E)
    assert out.dtype == x.dtype
    # bf16 MXU operands => looser tolerance than pure f32.
    assert jnp.allclose(out, ref, atol=5e-2, rtol=5e-2), "mismatch vs reference"

    print("KERNEL_OK")
</pallas_src>

<mosaic_0001>
module attributes {stable_mosaic.version = 11 : i64} {
  func.func @_qkv_proj_kernel(%arg0: i32, %arg1: i32, %arg2: memref<1x8x128xbf16, #tpu.memory_space<vmem>>, %arg3: memref<128x128xbf16, #tpu.memory_space<vmem>>, %arg4: memref<1x128xf32, #tpu.memory_space<vmem>>, %arg5: memref<128x128xbf16, #tpu.memory_space<vmem>>, %arg6: memref<1x128xf32, #tpu.memory_space<vmem>>, %arg7: memref<128x128xbf16, #tpu.memory_space<vmem>>, %arg8: memref<1x128xf32, #tpu.memory_space<vmem>>, %arg9: memref<1x8x128xbf16, #tpu.memory_space<vmem>>, %arg10: memref<1x8x128xbf16, #tpu.memory_space<vmem>>, %arg11: memref<1x8x128xbf16, #tpu.memory_space<vmem>>) attributes {dimension_semantics = [#tpu.dimension_semantics<parallel>, #tpu.dimension_semantics<parallel>], iteration_bounds = array<i64: 2, 1>, scalar_prefetch = 0 : i64, scratch_operands = 0 : i64, tpu.core_type = #tpu.core_type<tc>, window_params = [{transform_indices = @transform_0, window_bounds = array<i64: 1, 8, 128>}, {pipeline_mode = #tpu.pipeline_mode<synchronous>, transform_indices = @transform_1, window_bounds = array<i64: 128, 128>}, {pipeline_mode = #tpu.pipeline_mode<synchronous>, transform_indices = @transform_2, window_bounds = array<i64: 1, 128>}, {pipeline_mode = #tpu.pipeline_mode<synchronous>, transform_indices = @transform_3, window_bounds = array<i64: 128, 128>}, {pipeline_mode = #tpu.pipeline_mode<synchronous>, transform_indices = @transform_4, window_bounds = array<i64: 1, 128>}, {pipeline_mode = #tpu.pipeline_mode<synchronous>, transform_indices = @transform_5, window_bounds = array<i64: 128, 128>}, {pipeline_mode = #tpu.pipeline_mode<synchronous>, transform_indices = @transform_6, window_bounds = array<i64: 1, 128>}, {transform_indices = @transform_7, window_bounds = array<i64: 1, 8, 128>}, {transform_indices = @transform_8, window_bounds = array<i64: 1, 8, 128>}, {transform_indices = @transform_9, window_bounds = array<i64: 1, 8, 128>}]} {
    %c0 = arith.constant 0 : index
    %c0_0 = arith.constant 0 : index
    %c0_1 = arith.constant 0 : index
    %0 = vector.load %arg2[%c0, %c0_0, %c0_1] : memref<1x8x128xbf16, #tpu.memory_space<vmem>>, vector<1x8x128xbf16>
    %1 = vector.shape_cast %0 : vector<1x8x128xbf16> to vector<8x128xbf16>
    %c0_2 = arith.constant 0 : index
    %c0_3 = arith.constant 0 : index
    %2 = vector.load %arg3[%c0_2, %c0_3] : memref<128x128xbf16, #tpu.memory_space<vmem>>, vector<128x128xbf16>
    %cst = arith.constant dense<0.000000e+00> : vector<8x128xf32>
    %3 = tpu.matmul %1, %2, %cst {dimension_numbers = #tpu.dot_dimension_numbers<[1], [0], [0], [1], [0, 0, 1, 1], [], []>} : vector<8x128xbf16>, vector<128x128xbf16>, vector<8x128xf32> -> vector<8x128xf32>
    %c0_4 = arith.constant 0 : index
    %c0_5 = arith.constant 0 : index
    %4 = vector.load %arg4[%c0_4, %c0_5] : memref<1x128xf32, #tpu.memory_space<vmem>>, vector<1x128xf32>
    %5 = vector.broadcast %4 : vector<1x128xf32> to vector<8x128xf32>
    %6 = arith.addf %3, %5 : vector<8x128xf32>
    %c0_6 = arith.constant 0 : index
    %c0_7 = arith.constant 0 : index
    %7 = vector.load %arg5[%c0_6, %c0_7] : memref<128x128xbf16, #tpu.memory_space<vmem>>, vector<128x128xbf16>
    %cst_8 = arith.constant dense<0.000000e+00> : vector<8x128xf32>
    %8 = tpu.matmul %1, %7, %cst_8 {dimension_numbers = #tpu.dot_dimension_numbers<[1], [0], [0], [1], [0, 0, 1, 1], [], []>} : vector<8x128xbf16>, vector<128x128xbf16>, vector<8x128xf32> -> vector<8x128xf32>
    %c0_9 = arith.constant 0 : index
    %c0_10 = arith.constant 0 : index
    %9 = vector.load %arg6[%c0_9, %c0_10] : memref<1x128xf32, #tpu.memory_space<vmem>>, vector<1x128xf32>
    %10 = vector.broadcast %9 : vector<1x128xf32> to vector<8x128xf32>
    %11 = arith.addf %8, %10 : vector<8x128xf32>
    %c0_11 = arith.constant 0 : index
    %c0_12 = arith.constant 0 : index
    %12 = vector.load %arg7[%c0_11, %c0_12] : memref<128x128xbf16, #tpu.memory_space<vmem>>, vector<128x128xbf16>
    %cst_13 = arith.constant dense<0.000000e+00> : vector<8x128xf32>
    %13 = tpu.matmul %1, %12, %cst_13 {dimension_numbers = #tpu.dot_dimension_numbers<[1], [0], [0], [1], [0, 0, 1, 1], [], []>} : vector<8x128xbf16>, vector<128x128xbf16>, vector<8x128xf32> -> vector<8x128xf32>
    %c0_14 = arith.constant 0 : index
    %c0_15 = arith.constant 0 : index
    %14 = vector.load %arg8[%c0_14, %c0_15] : memref<1x128xf32, #tpu.memory_space<vmem>>, vector<1x128xf32>
    %15 = vector.broadcast %14 : vector<1x128xf32> to vector<8x128xf32>
    %16 = arith.addf %13, %15 : vector<8x128xf32>
    %cst_16 = arith.constant 0.176776692 : f32
    %17 = vector.broadcast %cst_16 : f32 to vector<8x128xf32>
    %18 = arith.mulf %6, %17 : vector<8x128xf32>
    %19 = arith.truncf %18 : vector<8x128xf32> to vector<8x128xbf16>
    %c0_17 = arith.constant 0 : index
    %c0_18 = arith.constant 0 : index
    %c0_19 = arith.constant 0 : index
    %20 = vector.load %arg9[%c0_17, %c0_18, %c0_19] : memref<1x8x128xbf16, #tpu.memory_space<vmem>>, vector<1x8x128xbf16>
    %21 = vector.shape_cast %20 : vector<1x8x128xbf16> to vector<8x128xbf16>
    %22 = vector.shape_cast %19 : vector<8x128xbf16> to vector<1x8x128xbf16>
    tpu.vector_store %arg9[%c0_17, %c0_18, %c0_19], %22 {strides = array<i32>} : memref<1x8x128xbf16, #tpu.memory_space<vmem>>, vector<1x8x128xbf16>,
    %23 = arith.truncf %11 : vector<8x128xf32> to vector<8x128xbf16>
    %c0_20 = arith.constant 0 : index
    %c0_21 = arith.constant 0 : index
    %c0_22 = arith.constant 0 : index
    %24 = vector.load %arg10[%c0_20, %c0_21, %c0_22] : memref<1x8x128xbf16, #tpu.memory_space<vmem>>, vector<1x8x128xbf16>
    %25 = vector.shape_cast %24 : vector<1x8x128xbf16> to vector<8x128xbf16>
    %26 = vector.shape_cast %23 : vector<8x128xbf16> to vector<1x8x128xbf16>
    tpu.vector_store %arg10[%c0_20, %c0_21, %c0_22], %26 {strides = array<i32>} : memref<1x8x128xbf16, #tpu.memory_space<vmem>>, vector<1x8x128xbf16>,
    %27 = arith.truncf %16 : vector<8x128xf32> to vector<8x128xbf16>
    %c0_23 = arith.constant 0 : index
    %c0_24 = arith.constant 0 : index
    %c0_25 = arith.constant 0 : index
    %28 = vector.load %arg11[%c0_23, %c0_24, %c0_25] : memref<1x8x128xbf16, #tpu.memory_space<vmem>>, vector<1x8x128xbf16>
    %29 = vector.shape_cast %28 : vector<1x8x128xbf16> to vector<8x128xbf16>
    %30 = vector.shape_cast %27 : vector<8x128xbf16> to vector<1x8x128xbf16>
    tpu.vector_store %arg11[%c0_23, %c0_24, %c0_25], %30 {strides = array<i32>} : memref<1x8x128xbf16, #tpu.memory_space<vmem>>, vector<1x8x128xbf16>,
    return
  }
  func.func @transform_0(%arg0: i32, %arg1: i32) -> (i32, i32, i32) {
    %c0_i32 = arith.constant 0 : i32
    %c0_i32_0 = arith.constant 0 : i32
    return %arg0, %arg1, %c0_i32 : i32, i32, i32
  }
  func.func @transform_1(%arg0: i32, %arg1: i32) -> (i32, i32) {
    %c0_i32 = arith.constant 0 : i32
    %c0_i32_0 = arith.constant 0 : i32
    %c0_i32_1 = arith.constant 0 : i32
    return %c0_i32, %c0_i32_0 : i32, i32
  }
  func.func @transform_2(%arg0: i32, %arg1: i32) -> (i32, i32) {
    %c0_i32 = arith.constant 0 : i32
    %c0_i32_0 = arith.constant 0 : i32
    %c0_i32_1 = arith.constant 0 : i32
    return %c0_i32, %c0_i32_0 : i32, i32
  }
  func.func @transform_3(%arg0: i32, %arg1: i32) -> (i32, i32) {
    %c0_i32 = arith.constant 0 : i32
    %c0_i32_0 = arith.constant 0 : i32
    %c0_i32_1 = arith.constant 0 : i32
    return %c0_i32, %c0_i32_0 : i32, i32
  }
  func.func @transform_4(%arg0: i32, %arg1: i32) -> (i32, i32) {
    %c0_i32 = arith.constant 0 : i32
    %c0_i32_0 = arith.constant 0 : i32
    %c0_i32_1 = arith.constant 0 : i32
    return %c0_i32, %c0_i32_0 : i32, i32
  }
  func.func @transform_5(%arg0: i32, %arg1: i32) -> (i32, i32) {
    %c0_i32 = arith.constant 0 : i32
    %c0_i32_0 = arith.constant 0 : i32
    %c0_i32_1 = arith.constant 0 : i32
    return %c0_i32, %c0_i32_0 : i32, i32
  }
  func.func @transform_6(%arg0: i32, %arg1: i32) -> (i32, i32) {
    %c0_i32 = arith.constant 0 : i32
    %c0_i32_0 = arith.constant 0 : i32
    %c0_i32_1 = arith.constant 0 : i32
    return %c0_i32, %c0_i32_0 : i32, i32
  }
  func.func @transform_7(%arg0: i32, %arg1: i32) -> (i32, i32, i32) {
    %c0_i32 = arith.constant 0 : i32
    %c0_i32_0 = arith.constant 0 : i32
    return %arg0, %arg1, %c0_i32 : i32, i32, i32
  }
  func.func @transform_8(%arg0: i32, %arg1: i32) -> (i32, i32, i32) {
    %c0_i32 = arith.constant 0 : i32
    %c0_i32_0 = arith.constant 0 : i32
    return %arg0, %arg1, %c0_i32 : i32, i32, i32
  }
  func.func @transform_9(%arg0: i32, %arg1: i32) -> (i32, i32, i32) {
    %c0_i32 = arith.constant 0 : i32
    %c0_i32_0 = arith.constant 0 : i32
    return %arg0, %arg1, %c0_i32 : i32, i32, i32
  }
}

module attributes {stable_mosaic.version = 11 : i64} {
  func.func @_qkv_proj_kernel(%arg0: i32, %arg1: i32, %arg2: memref<1x8x128xbf16, #tpu.memory_space<vmem>>, %arg3: memref<128x128xbf16, #tpu.memory_space<vmem>>, %arg4: memref<1x128xf32, #tpu.memory_space<vmem>>, %arg5: memref<128x128xbf16, #tpu.memory_space<vmem>>, %arg6: memref<1x128xf32, #tpu.memory_space<vmem>>, %arg7: memref<128x128xbf16, #tpu.memory_space<vmem>>, %arg8: memref<1x128xf32, #tpu.memory_space<vmem>>, %arg9: memref<1x8x128xbf16, #tpu.memory_space<vmem>>, %arg10: memref<1x8x128xbf16, #tpu.memory_space<vmem>>, %arg11: memref<1x8x128xbf16, #tpu.memory_space<vmem>>) attributes {dimension_semantics = [#tpu.dimension_semantics<parallel>, #tpu.dimension_semantics<parallel>], iteration_bounds = array<i64: 2, 1>, scalar_prefetch = 0 : i64, scratch_operands = 0 : i64, tpu.core_type = #tpu.core_type<tc>, window_params = [{transform_indices = @transform_0, window_bounds = array<i64: 1, 8, 128>}, {pipeline_mode = #tpu.pipeline_mode<synchronous>, transform_indices = @transform_1, window_bounds = array<i64: 128, 128>}, {pipeline_mode = #tpu.pipeline_mode<synchronous>, transform_indices = @transform_2, window_bounds = array<i64: 1, 128>}, {pipeline_mode = #tpu.pipeline_mode<synchronous>, transform_indices = @transform_3, window_bounds = array<i64: 128, 128>}, {pipeline_mode = #tpu.pipeline_mode<synchronous>, transform_indices = @transform_4, window_bounds = array<i64: 1, 128>}, {pipeline_mode = #tpu.pipeline_mode<synchronous>, transform_indices = @transform_5, window_bounds = array<i64: 128, 128>}, {pipeline_mode = #tpu.pipeline_mode<synchronous>, transform_indices = @transform_6, window_bounds = array<i64: 1, 128>}, {transform_indices = @transform_7, window_bounds = array<i64: 1, 8, 128>}, {transform_indices = @transform_8, window_bounds = array<i64: 1, 8, 128>}, {transform_indices = @transform_9, window_bounds = array<i64: 1, 8, 128>}]} {
    %c0 = arith.constant 0 : index
    %c0_0 = arith.constant 0 : index
    %c0_1 = arith.constant 0 : index
    %0 = vector.load %arg2[%c0, %c0_0, %c0_1] : memref<1x8x128xbf16, #tpu.memory_space<vmem>>, vector<1x8x128xbf16>
    %1 = vector.shape_cast %0 : vector<1x8x128xbf16> to vector<8x128xbf16>
    %c0_2 = arith.constant 0 : index
    %c0_3 = arith.constant 0 : index
    %2 = vector.load %arg3[%c0_2, %c0_3] : memref<128x128xbf16, #tpu.memory_space<vmem>>, vector<128x128xbf16>
    %cst = arith.constant dense<0.000000e+00> : vector<8x128xf32>
    %3 = tpu.matmul %1, %2, %cst {dimension_numbers = #tpu.dot_dimension_numbers<[1], [0], [0], [1], [0, 0, 1, 1], [], []>} : vector<8x128xbf16>, vector<128x128xbf16>, vector<8x128xf32> -> vector<8x128xf32>
    %c0_4 = arith.constant 0 : index
    %c0_5 = arith.constant 0 : index
    %4 = vector.load %arg4[%c0_4, %c0_5] : memref<1x128xf32, #tpu.memory_space<vmem>>, vector<1x128xf32>
    %5 = vector.broadcast %4 : vector<1x128xf32> to vector<8x128xf32>
    %6 = arith.addf %3, %5 : vector<8x128xf32>
    %c0_6 = arith.constant 0 : index
    %c0_7 = arith.constant 0 : index
    %7 = vector.load %arg5[%c0_6, %c0_7] : memref<128x128xbf16, #tpu.memory_space<vmem>>, vector<128x128xbf16>
    %cst_8 = arith.constant dense<0.000000e+00> : vector<8x128xf32>
    %8 = tpu.matmul %1, %7, %cst_8 {dimension_numbers = #tpu.dot_dimension_numbers<[1], [0], [0], [1], [0, 0, 1, 1], [], []>} : vector<8x128xbf16>, vector<128x128xbf16>, vector<8x128xf32> -> vector<8x128xf32>
    %c0_9 = arith.constant 0 : index
    %c0_10 = arith.constant 0 : index
    %9 = vector.load %arg6[%c0_9, %c0_10] : memref<1x128xf32, #tpu.memory_space<vmem>>, vector<1x128xf32>
    %10 = vector.broadcast %9 : vector<1x128xf32> to vector<8x128xf32>
    %11 = arith.addf %8, %10 : vector<8x128xf32>
    %c0_11 = arith.constant 0 : index
    %c0_12 = arith.constant 0 : index
    %12 = vector.load %arg7[%c0_11, %c0_12] : memref<128x128xbf16, #tpu.memory_space<vmem>>, vector<128x128xbf16>
    %cst_13 = arith.constant dense<0.000000e+00> : vector<8x128xf32>
    %13 = tpu.matmul %1, %12, %cst_13 {dimension_numbers = #tpu.dot_dimension_numbers<[1], [0], [0], [1], [0, 0, 1, 1], [], []>} : vector<8x128xbf16>, vector<128x128xbf16>, vector<8x128xf32> -> vector<8x128xf32>
    %c0_14 = arith.constant 0 : index
    %c0_15 = arith.constant 0 : index
    %14 = vector.load %arg8[%c0_14, %c0_15] : memref<1x128xf32, #tpu.memory_space<vmem>>, vector<1x128xf32>
    %15 = vector.broadcast %14 : vector<1x128xf32> to vector<8x128xf32>
    %16 = arith.addf %13, %15 : vector<8x128xf32>
    %cst_16 = arith.constant 0.176776692 : f32
    %17 = vector.broadcast %cst_16 : f32 to vector<8x128xf32>
    %18 = arith.mulf %6, %17 : vector<8x128xf32>
    %19 = arith.truncf %18 : vector<8x128xf32> to vector<8x128xbf16>
    %c0_17 = arith.constant 0 : index
    %c0_18 = arith.constant 0 : index
    %c0_19 = arith.constant 0 : index
    %20 = vector.load %arg9[%c0_17, %c0_18, %c0_19] : memref<1x8x128xbf16, #tpu.memory_space<vmem>>, vector<1x8x128xbf16>
    %21 = vector.shape_cast %20 : vector<1x8x128xbf16> to vector<8x128xbf16>
    %22 = vector.shape_cast %19 : vector<8x128xbf16> to vector<1x8x128xbf16>
    tpu.vector_store %arg9[%c0_17, %c0_18, %c0_19], %22 {strides = array<i32>} : memref<1x8x128xbf16, #tpu.memory_space<vmem>>, vector<1x8x128xbf16>,
    %23 = arith.truncf %11 : vector<8x128xf32> to vector<8x128xbf16>
    %c0_20 = arith.constant 0 : index
    %c0_21 = arith.constant 0 : index
    %c0_22 = arith.constant 0 : index
    %24 = vector.load %arg10[%c0_20, %c0_21, %c0_22] : memref<1x8x128xbf16, #tpu.memory_space<vmem>>, vector<1x8x128xbf16>
    %25 = vector.shape_cast %24 : vector<1x8x128xbf16> to vector<8x128xbf16>
    %26 = vector.shape_cast %23 : vector<8x128xbf16> to vector<1x8x128xbf16>
    tpu.vector_store %arg10[%c0_20, %c0_21, %c0_22], %26 {strides = array<i32>} : memref<1x8x128xbf16, #tpu.memory_space<vmem>>, vector<1x8x128xbf16>,
    %27 = arith.truncf %16 : vector<8x128xf32> to vector<8x128xbf16>
    %c0_23 = arith.constant 0 : index
    %c0_24 = arith.constant 0 : index
    %c0_25 = arith.constant 0 : index
    %28 = vector.load %arg11[%c0_23, %c0_24, %c0_25] : memref<1x8x128xbf16, #tpu.memory_space<vmem>>, vector<1x8x128xbf16>
    %29 = vector.shape_cast %28 : vector<1x8x128xbf16> to vector<8x128xbf16>
    %30 = vector.shape_cast %27 : vector<8x128xbf16> to vector<1x8x128xbf16>
    tpu.vector_store %arg11[%c0_23, %c0_24, %c0_25], %30 {strides = array<i32>} : memref<1x8x128xbf16, #tpu.memory_space<vmem>>, vector<1x8x128xbf16>,
    return
  }
  func.func @transform_0(%arg0: i32, %arg1: i32) -> (i32, i32, i32) {
    %c0_i32 = arith.constant 0 : i32
    %c0_i32_0 = arith.constant 0 : i32
    return %arg0, %arg1, %c0_i32 : i32, i32, i32
  }
  func.func @transform_1(%arg0: i32, %arg1: i32) -> (i32, i32) {
    %c0_i32 = arith.constant 0 : i32
    %c0_i32_0 = arith.constant 0 : i32
    %c0_i32_1 = arith.constant 0 : i32
    return %c0_i32, %c0_i32_0 : i32, i32
  }
  func.func @transform_2(%arg0: i32, %arg1: i32) -> (i32, i32) {
    %c0_i32 = arith.constant 0 : i32
    %c0_i32_0 = arith.constant 0 : i32
    %c0_i32_1 = arith.constant 0 : i32
    return %c0_i32, %c0_i32_0 : i32, i32
  }
  func.func @transform_3(%arg0: i32, %arg1: i32) -> (i32, i32) {
    %c0_i32 = arith.constant 0 : i32
    %c0_i32_0 = arith.constant 0 : i32
    %c0_i32_1 = arith.constant 0 : i32
    return %c0_i32, %c0_i32_0 : i32, i32
  }
  func.func @transform_4(%arg0: i32, %arg1: i32) -> (i32, i32) {
    %c0_i32 = arith.constant 0 : i32
    %c0_i32_0 = arith.constant 0 : i32
    %c0_i32_1 = arith.constant 0 : i32
    return %c0_i32, %c0_i32_0 : i32, i32
  }
  func.func @transform_5(%arg0: i32, %arg1: i32) -> (i32, i32) {
    %c0_i32 = arith.constant 0 : i32
    %c0_i32_0 = arith.constant 0 : i32
    %c0_i32_1 = arith.constant 0 : i32
    return %c0_i32, %c0_i32_0 : i32, i32
  }
  func.func @transform_6(%arg0: i32, %arg1: i32) -> (i32, i32) {
    %c0_i32 = arith.constant 0 : i32
    %c0_i32_0 = arith.constant 0 : i32
    %c0_i32_1 = arith.constant 0 : i32
    return %c0_i32, %c0_i32_0 : i32, i32
  }
  func.func @transform_7(%arg0: i32, %arg1: i32) -> (i32, i32, i32) {
    %c0_i32 = arith.constant 0 : i32
    %c0_i32_0 = arith.constant 0 : i32
    return %arg0, %arg1, %c0_i32 : i32, i32, i32
  }
  func.func @transform_8(%arg0: i32, %arg1: i32) -> (i32, i32, i32) {
    %c0_i32 = arith.constant 0 : i32
    %c0_i32_0 = arith.constant 0 : i32
    return %arg0, %arg1, %c0_i32 : i32, i32, i32
  }
  func.func @transform_9(%arg0: i32, %arg1: i32) -> (i32, i32, i32) {
    %c0_i32 = arith.constant 0 : i32
    %c0_i32_0 = arith.constant 0 : i32
    return %arg0, %arg1, %c0_i32 : i32, i32, i32
  }
}

</mosaic_0001>

<llo_original>
// kernel: tpu_custom_call.1
$region0: #{tpu_custom_call.1}
  #allocation0 [shape = 'u32[]', space=smem, size = 0x4, offset = 0x4, fixed_abs, tag = 'smem constant byte address 0x4 - core index']
  #allocation1 [shape = 'u32[144,128]{1,0:T(1,128)}', space=vmem, size = 0x12000, scoped, tag = 'internal scratch']
  %s0 = inlined_call_operand.hbm [shape: bf16[2,8,128], index: 0, kind: input, shape index: {}]
  %s1 = inlined_call_operand.hbm [shape: bf16[128,128], index: 1, kind: input, shape index: {}]
  %s2 = inlined_call_operand.vmem [shape: f32[1,128], index: 2, kind: input, shape index: {}]
  %s3 = inlined_call_operand.hbm [shape: bf16[128,128], index: 3, kind: input, shape index: {}]
  %s4 = inlined_call_operand.vmem [shape: f32[1,128], index: 4, kind: input, shape index: {}]
  %s5 = inlined_call_operand.hbm [shape: bf16[128,128], index: 5, kind: input, shape index: {}]
  %s6 = inlined_call_operand.vmem [shape: f32[1,128], index: 6, kind: input, shape index: {}]
  %s7 = inlined_call_operand.hbm [shape: bf16[2,8,128], index: 7, kind: output, shape index: {0}]
  %s8 = inlined_call_operand.hbm [shape: bf16[2,8,128], index: 8, kind: output, shape index: {1}]
  %s9 = inlined_call_operand.hbm [shape: bf16[2,8,128], index: 9, kind: output, shape index: {2}]
  %10 = xla_tuple %s7, %s8, %s9
  %s11 = sld [smem:[#allocation0]]
  $region93: #{tpu_custom_call.1} parent=0
    _
  %s13 = ssub.s32 1, %s11
  %s14 = scalar_select 0, %s13, %s11
  $region1: #{tpu_custom_call.1} parent=0
    #allocation2 [shape = 'u8[4096]{0}', space=vmem, size = 0x1000, scoped, tag = 'input window, operand 0']
    #allocation3 [shape = 's32[2]{0}', space=sflag, size = 0x8, scoped, tag = 'scoped memory for tpu_custom_call.1']
    #allocation4 [shape = 's32[2]{0}', space=sflag, size = 0x8, scoped, tag = 'scoped memory for tpu_custom_call.1']
    #allocation5 [shape = 'u8[32768]{0}', space=vmem, size = 0x8000, scoped, tag = 'input window, operand 1, single buffered']
    #allocation6 [shape = 's32[1]{0}', space=sflag, size = 0x4, scoped, tag = 'scoped memory for tpu_custom_call.1']
    #allocation7 [shape = 'u8[32768]{0}', space=vmem, size = 0x8000, scoped, tag = 'input window, operand 3, single buffered']
    #allocation8 [shape = 'u8[32768]{0}', space=vmem, size = 0x8000, scoped, tag = 'input window, operand 5, single buffered']
    #allocation9 [shape = 's32[1]{0}', space=sflag, size = 0x4, scoped, tag = 'scoped memory for tpu_custom_call.1']
    #allocation10 [shape = 'u8[4096]{0}', space=vmem, size = 0x1000, scoped, tag = 'output window, operand 0']
    #allocation11 [shape = 'u8[4096]{0}', space=vmem, size = 0x1000, scoped, tag = 'output window, operand 1']
    #allocation12 [shape = 's32[2]{0}', space=sflag, size = 0x8, scoped, tag = 'scoped memory for tpu_custom_call.1']
    #allocation13 [shape = 'u8[4096]{0}', space=vmem, size = 0x1000, scoped, tag = 'output window, operand 2']
    %15 = vsyncpa [#allocation3], 0
    %s16 = scalar_lea.sflag [#allocation3], 1
    %17 = vsyncpa %s16, 0
    %18 = vsyncpa [#allocation6], 0
    %19 = vsyncpa [#allocation9], 0
    %20 = vsyncpa [#allocation4], 0
    %s21 = scalar_lea.sflag [#allocation4], 1
    %22 = vsyncpa %s21, 0
    %23 = vsyncpa [#allocation12], 0
    %s24 = scalar_lea.sflag [#allocation12], 1
    %25 = vsyncpa %s24, 0
    loop: start=0, step=1, limit=4
    $region2: #{tpu_custom_call.1} parent=1 // loop_pre_header
      _
    $region3: #{tpu_custom_call.1} parent=1 // loop_header
      %s27 = sphi 0, %s31
      %p28 = scmp.ge.s32.totalorder %s27, 4
      %s34 = sphi 0, %s46
      %s35 = sphi 0, %s42
      %s36 = sphi 0, %s34
      %s37 = sphi 0, %s35
      %s38 = sphi 0, %s36
      %s39 = sphi 0, %s37
      %s51 = sphi 0, %s53
      %s54 = sphi 0, %s51
      %s55 = sphi 0, %s54
      %s71 = sphi 0, %s55
      %s75 = sphi 0, %s75
      %s77 = sphi 0, %s75
      %s78 = sphi 0, %s77
      %s92 = sphi 0, %s78
      %s96 = sphi 0, %s96
      %s98 = sphi 0, %s96
      %s99 = sphi 0, %s98
      %s113 = sphi 0, %s99
      %s117 = sphi 0, %s117
      %s119 = sphi 0, %s117
      %s120 = sphi 0, %s119
      %s134 = sphi 0, %s120
      %s138 = sphi 0, %s138
      %s140 = sphi 0, %s138
      %s141 = sphi 0, %s140
      %s155 = sphi 0, %s141
      %s159 = sphi 0, %s159
      %s161 = sphi 0, %s159
      %s162 = sphi 0, %s161
      %s176 = sphi 0, %s162
      %s180 = sphi 0, %s180
      %s182 = sphi 0, %s180
      %s183 = sphi 0, %s182
      %s197 = sphi 0, %s183
      %s205 = sphi 0, %s207
      %s208 = sphi 0, %s205
      %s209 = sphi 0, %s208
      %s225 = sphi 0, %s209
      %s233 = sphi 0, %s235
      %s236 = sphi 0, %s233
      %s237 = sphi 0, %s236
      %s253 = sphi 0, %s237
      %s261 = sphi 0, %s263
      %s264 = sphi 0, %s261
      %s265 = sphi 0, %s264
      %s281 = sphi 0, %s265
    $region4: #{tpu_custom_call.1} parent=1 // loop_header_branch
      %30 = sbr.rel (%p28) target = $region8
    $region5: #{tpu_custom_call.1} parent=1 // loop_body
      %s32 = ssub.s32 %s27, 1
      %s33 = ssub.s32 %s27, 2
      %s40 = sadd.s32 1, %s35
      %p41 = scmp.ge.s32.totalorder %s40, 1
      %s42 = scalar_select %p41, 0, %s40
      %s43 = sadd.s32 1, %s34
      %s44 = scalar_select %p41, %s43, %s34
      %p45 = scmp.ge.s32.totalorder %s44, 2
      %s46 = scalar_select %p45, 0, %s44
      %s47 = ssub.s32 %s34, %s46
      %s48 = ssub.s32 %s35, %s42
      %s49 = sor.u32 %s47, %s48
      %p50 = scmp.eq.s32.totalorder %s49, 0
      %s52 = sadd.s32 %s51, 1
      %s53 = scalar_select %p50, %s51, %s52
      %p56 = pneg %p50
      %p57 = scmp.eq.s32.totalorder %s27, 1
      %p58 = por %p56, %p57
      %p59 = scmp.ne.s32.totalorder %s51, %s54
      %p60 = scmp.eq.s32.totalorder %s27, 0
      %p61 = por %p59, %p60
      %p62 = scmp.ne.s32.totalorder %s51, %s54
      %p63 = scmp.eq.s32.totalorder %s32, 1
      %p64 = por %p62, %p63
      %p65 = scmp.ne.s32.totalorder %s54, %s55
      %p66 = scmp.eq.s32.totalorder %s32, 0
      %p67 = por %p65, %p66
      %p68 = scmp.ne.s32.totalorder %s54, %s55
      %p69 = scmp.eq.s32.totalorder %s33, 1
      %p70 = por %p68, %p69
      %p72 = scmp.ne.s32.totalorder %s55, %s71
      %p73 = scmp.eq.s32.totalorder %s33, 0
      %p74 = por %p72, %p73
      %s76 = sadd.s32 %s75, 1
      %p79 = scmp.eq.s32.totalorder %s27, 1
      %p80 = scmp.ne.s32.totalorder %s75, %s77
      %p81 = scmp.eq.s32.totalorder %s27, 0
      %p82 = por %p80, %p81
      %p83 = scmp.ne.s32.totalorder %s75, %s77
      %p84 = scmp.eq.s32.totalorder %s32, 1
      %p85 = por %p83, %p84
      %p86 = scmp.ne.s32.totalorder %s77, %s78
      %p87 = scmp.eq.s32.totalorder %s32, 0
      %p88 = por %p86, %p87
      %p89 = scmp.ne.s32.totalorder %s77, %s78
      %p90 = scmp.eq.s32.totalorder %s33, 1
      %p91 = por %p89, %p90
      %p93 = scmp.ne.s32.totalorder %s78, %s92
      %p94 = scmp.eq.s32.totalorder %s33, 0
      %p95 = por %p93, %p94
      %s97 = sadd.s32 %s96, 1
      %p100 = scmp.eq.s32.totalorder %s27, 1
      %p101 = scmp.ne.s32.totalorder %s96, %s98
      %p102 = scmp.eq.s32.totalorder %s27, 0
      %p103 = por %p101, %p102
      %p104 = scmp.ne.s32.totalorder %s96, %s98
      %p105 = scmp.eq.s32.totalorder %s32, 1
      %p106 = por %p104, %p105
      %p107 = scmp.ne.s32.totalorder %s98, %s99
      %p108 = scmp.eq.s32.totalorder %s32, 0
      %p109 = por %p107, %p108
      %p110 = scmp.ne.s32.totalorder %s98, %s99
      %p111 = scmp.eq.s32.totalorder %s33, 1
      %p112 = por %p110, %p111
      %p114 = scmp.ne.s32.totalorder %s99, %s113
      %p115 = scmp.eq.s32.totalorder %s33, 0
      %p116 = por %p114, %p115
      %s118 = sadd.s32 %s117, 1
      %p121 = scmp.eq.s32.totalorder %s27, 1
      %p122 = scmp.ne.s32.totalorder %s117, %s119
      %p123 = scmp.eq.s32.totalorder %s27, 0
      %p124 = por %p122, %p123
      %p125 = scmp.ne.s32.totalorder %s117, %s119
      %p126 = scmp.eq.s32.totalorder %s32, 1
      %p127 = por %p125, %p126
      %p128 = scmp.ne.s32.totalorder %s119, %s120
      %p129 = scmp.eq.s32.totalorder %s32, 0
      %p130 = por %p128, %p129
      %p131 = scmp.ne.s32.totalorder %s119, %s120
      %p132 = scmp.eq.s32.totalorder %s33, 1
      %p133 = por %p131, %p132
      %p135 = scmp.ne.s32.totalorder %s120, %s134
      %p136 = scmp.eq.s32.totalorder %s33, 0
      %p137 = por %p135, %p136
      %s139 = sadd.s32 %s138, 1
      %p142 = scmp.eq.s32.totalorder %s27, 1
      %p143 = scmp.ne.s32.totalorder %s138, %s140
      %p144 = scmp.eq.s32.totalorder %s27, 0
      %p145 = por %p143, %p144
      %p146 = scmp.ne.s32.totalorder %s138, %s140
      %p147 = scmp.eq.s32.totalorder %s32, 1
      %p148 = por %p146, %p147
      %p149 = scmp.ne.s32.totalorder %s140, %s141
      %p150 = scmp.eq.s32.totalorder %s32, 0
      %p151 = por %p149, %p150
      %p152 = scmp.ne.s32.totalorder %s140, %s141
      %p153 = scmp.eq.s32.totalorder %s33, 1
      %p154 = por %p152, %p153
      %p156 = scmp.ne.s32.totalorder %s141, %s155
      %p157 = scmp.eq.s32.totalorder %s33, 0
      %p158 = por %p156, %p157
      %s160 = sadd.s32 %s159, 1
      %p163 = scmp.eq.s32.totalorder %s27, 1
      %p164 = scmp.ne.s32.totalorder %s159, %s161
      %p165 = scmp.eq.s32.totalorder %s27, 0
      %p166 = por %p164, %p165
      %p167 = scmp.ne.s32.totalorder %s159, %s161
      %p168 = scmp.eq.s32.totalorder %s32, 1
      %p169 = por %p167, %p168
      %p170 = scmp.ne.s32.totalorder %s161, %s162
      %p171 = scmp.eq.s32.totalorder %s32, 0
      %p172 = por %p170, %p171
      %p173 = scmp.ne.s32.totalorder %s161, %s162
      %p174 = scmp.eq.s32.totalorder %s33, 1
      %p175 = por %p173, %p174
      %p177 = scmp.ne.s32.totalorder %s162, %s176
      %p178 = scmp.eq.s32.totalorder %s33, 0
      %p179 = por %p177, %p178
      %s181 = sadd.s32 %s180, 1
      %p184 = scmp.eq.s32.totalorder %s27, 1
      %p185 = scmp.ne.s32.totalorder %s180, %s182
      %p186 = scmp.eq.s32.totalorder %s27, 0
      %p187 = por %p185, %p186
      %p188 = scmp.ne.s32.totalorder %s180, %s182
      %p189 = scmp.eq.s32.totalorder %s32, 1
      %p190 = por %p188, %p189
      %p191 = scmp.ne.s32.totalorder %s182, %s183
      %p192 = scmp.eq.s32.totalorder %s32, 0
      %p193 = por %p191, %p192
      %p194 = scmp.ne.s32.totalorder %s182, %s183
      %p195 = scmp.eq.s32.totalorder %s33, 1
      %p196 = por %p194, %p195
      %p198 = scmp.ne.s32.totalorder %s183, %s197
      %p199 = scmp.eq.s32.totalorder %s33, 0
      %p200 = por %p198, %p199
      %s201 = ssub.s32 %s34, %s46
      %s202 = ssub.s32 %s35, %s42
      %s203 = sor.u32 %s201, %s202
      %p204 = scmp.eq.s32.totalorder %s203, 0
      %s206 = sadd.s32 %s205, 1
      %s207 = scalar_select %p204, %s205, %s206
      %p210 = pneg %p204
      %p211 = scmp.eq.s32.totalorder %s27, 1
      %p212 = por %p210, %p211
      %p213 = scmp.ne.s32.totalorder %s205, %s208
      %p214 = scmp.eq.s32.totalorder %s27, 0
      %p215 = por %p213, %p214
      %p216 = scmp.ne.s32.totalorder %s205, %s208
      %p217 = scmp.eq.s32.totalorder %s32, 1
      %p218 = por %p216, %p217
      %p219 = scmp.ne.s32.totalorder %s208, %s209
      %p220 = scmp.eq.s32.totalorder %s32, 0
      %p221 = por %p219, %p220
      %p222 = scmp.ne.s32.totalorder %s208, %s209
      %p223 = scmp.eq.s32.totalorder %s33, 1
      %p224 = por %p222, %p223
      %p226 = scmp.ne.s32.totalorder %s209, %s225
      %p227 = scmp.eq.s32.totalorder %s33, 0
      %p228 = por %p226, %p227
      %s229 = ssub.s32 %s34, %s46
      %s230 = ssub.s32 %s35, %s42
      %s231 = sor.u32 %s229, %s230
      %p232 = scmp.eq.s32.totalorder %s231, 0
      %s234 = sadd.s32 %s233, 1
      %s235 = scalar_select %p232, %s233, %s234
      %p238 = pneg %p232
      %p239 = scmp.eq.s32.totalorder %s27, 1
      %p240 = por %p238, %p239
      %p241 = scmp.ne.s32.totalorder %s233, %s236
      %p242 = scmp.eq.s32.totalorder %s27, 0
      %p243 = por %p241, %p242
      %p244 = scmp.ne.s32.totalorder %s233, %s236
      %p245 = scmp.eq.s32.totalorder %s32, 1
      %p246 = por %p244, %p245
      %p247 = scmp.ne.s32.totalorder %s236, %s237
      %p248 = scmp.eq.s32.totalorder %s32, 0
      %p249 = por %p247, %p248
      %p250 = scmp.ne.s32.totalorder %s236, %s237
      %p251 = scmp.eq.s32.totalorder %s33, 1
      %p252 = por %p250, %p251
      %p254 = scmp.ne.s32.totalorder %s237, %s253
      %p255 = scmp.eq.s32.totalorder %s33, 0
      %p256 = por %p254, %p255
      %s257 = ssub.s32 %s34, %s46
      %s258 = ssub.s32 %s35, %s42
      %s259 = sor.u32 %s257, %s258
      %p260 = scmp.eq.s32.totalorder %s259, 0
      %s262 = sadd.s32 %s261, 1
      %s263 = scalar_select %p260, %s261, %s262
      %p266 = pneg %p260
      %p267 = scmp.eq.s32.totalorder %s27, 1
      %p268 = por %p266, %p267
      %p269 = scmp.ne.s32.totalorder %s261, %s264
      %p270 = scmp.eq.s32.totalorder %s27, 0
      %p271 = por %p269, %p270
      %p272 = scmp.ne.s32.totalorder %s261, %s264
      %p273 = scmp.eq.s32.totalorder %s32, 1
      %p274 = por %p272, %p273
      %p275 = scmp.ne.s32.totalorder %s264, %s265
      %p276 = scmp.eq.s32.totalorder %s32, 0
      %p277 = por %p275, %p276
      %p278 = scmp.ne.s32.totalorder %s264, %s265
      %p279 = scmp.eq.s32.totalorder %s33, 1
      %p280 = por %p278, %p279
      %p282 = scmp.ne.s32.totalorder %s265, %s281
      %p283 = scmp.eq.s32.totalorder %s33, 0
      %p284 = por %p282, %p283
      %p285 = scmp.le.s32.totalorder 1, %s27
      %p286 = scmp.lt.s32.totalorder %s27, 3
      %p287 = pnand %p285, %p286
      %p288 = pneg %p287
      // Predicated region
      $region9: #{tpu_custom_call.1} parent=5 // pred_check
        _
      $region10: #{tpu_custom_call.1} parent=5 // pred_check_branch
        %290 = sbr.rel (%p287) target = $region12
      $region11: #{tpu_custom_call.1} parent=5 // pred_region
        %s291 = ssub.s32 %s27, 1
        // Predicated region
        $region13: #{tpu_custom_call.1} parent=11 // pred_check
          %p292 = pneg %p88
        $region14: #{tpu_custom_call.1} parent=11 // pred_check_branch
          %294 = sbr.rel (%p292) target = $region16
        $region15: #{tpu_custom_call.1} parent=11 // pred_region
          %s296 = ssub.s32 1024, 1024
          %297 = vsyncadd [#allocation6], %s296
          %s298 = sshll.u32 [#allocation5], 4
          %s299 = int_to_ptr.vmem [resolvable:$true] %s298
          %304 = dma.hbm_to_vmem [thread:$0]  %s1, 1024, %s299, [#allocation6], 64, 64, 4
        $region16: #{tpu_custom_call.1} parent=11 // pred_fallthru
          _
        // Predicated region
        $region17: #{tpu_custom_call.1} parent=11 // pred_check
          %p305 = pneg %p109
        $region18: #{tpu_custom_call.1} parent=11 // pred_check_branch
          %307 = sbr.rel (%p305) target = $region20
        $region19: #{tpu_custom_call.1} parent=11 // pred_region
          _
        $region20: #{tpu_custom_call.1} parent=11 // pred_fallthru
          _
        // Predicated region
        $region21: #{tpu_custom_call.1} parent=11 // pred_check
          %p308 = pneg %p130
        $region22: #{tpu_custom_call.1} parent=11 // pred_check_branch
          %310 = sbr.rel (%p308) target = $region24
        $region23: #{tpu_custom_call.1} parent=11 // pred_region
          %s312 = ssub.s32 1024, 1024
          %313 = vsyncadd [#allocation6], %s312
          %s314 = sshll.u32 [#allocation7], 4
          %s315 = int_to_ptr.vmem [resolvable:$true] %s314
          %320 = dma.hbm_to_vmem [thread:$0]  %s3, 1024, %s315, [#allocation6], 64, 64, 4
        $region24: #{tpu_custom_call.1} parent=11 // pred_fallthru
          _
        // Predicated region
        $region25: #{tpu_custom_call.1} parent=11 // pred_check
          %p321 = pneg %p151
        $region26: #{tpu_custom_call.1} parent=11 // pred_check_branch
          %323 = sbr.rel (%p321) target = $region28
        $region27: #{tpu_custom_call.1} parent=11 // pred_region
          _
        $region28: #{tpu_custom_call.1} parent=11 // pred_fallthru
          _
        // Predicated region
        $region29: #{tpu_custom_call.1} parent=11 // pred_check
          %p324 = pneg %p172
        $region30: #{tpu_custom_call.1} parent=11 // pred_check_branch
          %326 = sbr.rel (%p324) target = $region32
        $region31: #{tpu_custom_call.1} parent=11 // pred_region
          %s328 = ssub.s32 1024, 1024
          %329 = vsyncadd [#allocation9], %s328
          %s330 = sshll.u32 [#allocation8], 4
          %s331 = int_to_ptr.vmem [resolvable:$true] %s330
          %336 = dma.hbm_to_vmem [thread:$0]  %s5, 1024, %s331, [#allocation9], 64, 64, 4
        $region32: #{tpu_custom_call.1} parent=11 // pred_fallthru
          _
        // Predicated region
        $region33: #{tpu_custom_call.1} parent=11 // pred_check
          %p337 = pneg %p193
        $region34: #{tpu_custom_call.1} parent=11 // pred_check_branch
          %339 = sbr.rel (%p337) target = $region36
        $region35: #{tpu_custom_call.1} parent=11 // pred_region
          _
        $region36: #{tpu_custom_call.1} parent=11 // pred_fallthru
          _
      $region12: #{tpu_custom_call.1} parent=5 // pred_fallthru
        _
      %p340 = scmp.lt.s32.totalorder %s27, 2
      // Predicated region
      $region37: #{tpu_custom_call.1} parent=5 // pred_check
        %p341 = pneg %p340
      $region38: #{tpu_custom_call.1} parent=5 // pred_check_branch
        %343 = sbr.rel (%p341) target = $region40
      $region39: #{tpu_custom_call.1} parent=5 // pred_region
        // Predicated region
        $region41: #{tpu_custom_call.1} parent=39 // pred_check
          %p344 = pneg %p61
        $region42: #{tpu_custom_call.1} parent=39 // pred_check_branch
          %346 = sbr.rel (%p344) target = $region44
        $region43: #{tpu_custom_call.1} parent=39 // pred_region
          %s347 = sand.u32 %s51, 1
          %s348 = scalar_lea.sflag [#allocation3], %s347
          %s349 = sand.u32 %s51, 1
          %s350 = smul.addr %s349, 4
          %s351 = scalar_lea.vmem [#allocation2], %s350
          %s353 = ssub.s32 64, 64
          %354 = vsyncadd %s348, %s353
          %s355 = sadd.s32 %s35, %s34
          %s356 = smul.addr %s355, 64
          %s357 = scalar_lea.hbm %s0, %s356
          %s359 = sshll.u32 %s351, 4
          %s360 = int_to_ptr.vmem [resolvable:$true] %s359
          %362 = dma.hbm_to_vmem [thread:$0]  %s357, 64, %s360, %s348
        $region44: #{tpu_custom_call.1} parent=39 // pred_fallthru
          _
      $region40: #{tpu_custom_call.1} parent=5 // pred_fallthru
        _
      %p363 = scmp.le.s32.totalorder 1, %s27
      %p364 = scmp.lt.s32.totalorder %s27, 3
      %p365 = pnand %p363, %p364
      %p366 = pneg %p365
      // Predicated region
      $region45: #{tpu_custom_call.1} parent=5 // pred_check
        _
      $region46: #{tpu_custom_call.1} parent=5 // pred_check_branch
        %368 = sbr.rel (%p365) target = $region48
      $region47: #{tpu_custom_call.1} parent=5 // pred_region
        %s369 = ssub.s32 %s27, 1
        %s370 = sand.u32 %s54, 1
        %s371 = scalar_lea.sflag [#allocation3], %s370
        %s372 = sand.u32 %s54, 1
        %s373 = smul.addr %s372, 4
        %s374 = scalar_lea.vmem [#allocation2], %s373
        // Predicated region
        $region49: #{tpu_custom_call.1} parent=47 // pred_check
          %p375 = pneg %p67
        $region50: #{tpu_custom_call.1} parent=47 // pred_check_branch
          %377 = sbr.rel (%p375) target = $region52
        $region51: #{tpu_custom_call.1} parent=47 // pred_region
          %378 = dma.done %s371, 64
        $region52: #{tpu_custom_call.1} parent=47 // pred_fallthru
          _
        // Predicated region
        $region53: #{tpu_custom_call.1} parent=47 // pred_check
          %p379 = pneg %p88
        $region54: #{tpu_custom_call.1} parent=47 // pred_check_branch
          %381 = sbr.rel (%p379) target = $region56
        $region55: #{tpu_custom_call.1} parent=47 // pred_region
          %382 = dma.done [#allocation6], 1024
        $region56: #{tpu_custom_call.1} parent=47 // pred_fallthru
          _
        // Predicated region
        $region57: #{tpu_custom_call.1} parent=47 // pred_check
          %p383 = pneg %p130
        $region58: #{tpu_custom_call.1} parent=47 // pred_check_branch
          %385 = sbr.rel (%p383) target = $region60
        $region59: #{tpu_custom_call.1} parent=47 // pred_region
          %386 = dma.done [#allocation6], 1024
        $region60: #{tpu_custom_call.1} parent=47 // pred_fallthru
          _
        // Predicated region
        $region61: #{tpu_custom_call.1} parent=47 // pred_check
          %p387 = pneg %p172
        $region62: #{tpu_custom_call.1} parent=47 // pred_check_branch
          %389 = sbr.rel (%p387) target = $region64
        $region63: #{tpu_custom_call.1} parent=47 // pred_region
          %390 = dma.done [#allocation9], 1024
        $region64: #{tpu_custom_call.1} parent=47 // pred_fallthru
          _
        %s391 = sand.u32 %s54, 1
        %s392 = scalar_lea.sflag [#allocation3], %s391
        %s393 = sand.u32 %s54, 1
        %s394 = smul.addr %s393, 4
        %s395 = scalar_lea.vmem [#allocation2], %s394
        %p396 = pneg %p67
        %p397 = pneg %p64
        %p398 = pneg %p88
        %p399 = pneg %p85
        %p400 = pneg %p109
        %p401 = pneg %p106
        %p402 = pneg %p130
        %p403 = pneg %p127
        %p404 = pneg %p151
        %p405 = pneg %p148
        %p406 = pneg %p172
        %p407 = pneg %p169
        %p408 = pneg %p193
        %p409 = pneg %p190
        %p410 = pneg %p221
        %p411 = pneg %p218
        %s412 = sand.u32 %s208, 1
        %s413 = scalar_lea.sflag [#allocation4], %s412
        %s414 = sand.u32 %s208, 1
        %s415 = smul.addr %s414, 4
        %s416 = scalar_lea.vmem [#allocation10], %s415
        %p417 = pneg %p249
        %p418 = pneg %p246
        %s419 = sand.u32 %s32, 1
        %s420 = scalar_lea.sflag [#allocation12], %s419
        %s421 = sand.u32 %s236, 1
        %s422 = smul.addr %s421, 4
        %s423 = scalar_lea.vmem [#allocation11], %s422
        %p424 = pneg %p277
        %p425 = pneg %p274
        %s426 = sand.u32 %s32, 1
        %s427 = scalar_lea.sflag [#allocation12], %s426
        %s428 = sand.u32 %s264, 1
        %s429 = smul.addr %s428, 4
        %s430 = scalar_lea.vmem [#allocation13], %s429
        %v432 = vld [vmem:[%s374] sm:$0xf]
        %v433 = vld [vmem:[#allocation5] sm:$0xf]
        %v434 = vld [vmem:[#allocation5 + $0x4] sm:$0xf]
        %v435 = vld [vmem:[#allocation5 + $0x8] sm:$0xf]
        %v436 = vld [vmem:[#allocation5 + $0xc] sm:$0xf]
        %v437 = vld [vmem:[#allocation5 + $0x10] sm:$0xf]
        %v438 = vld [vmem:[#allocation5 + $0x14] sm:$0xf]
        %v439 = vld [vmem:[#allocation5 + $0x18] sm:$0xf]
        %v440 = vld [vmem:[#allocation5 + $0x1c] sm:$0xf]
        %v441 = vld [vmem:[#allocation5 + $0x20] sm:$0xf]
        %v442 = vld [vmem:[#allocation5 + $0x24] sm:$0xf]
        %v443 = vld [vmem:[#allocation5 + $0x28] sm:$0xf]
        %v444 = vld [vmem:[#allocation5 + $0x2c] sm:$0xf]
        %v445 = vld [vmem:[#allocation5 + $0x30] sm:$0xf]
        %v446 = vld [vmem:[#allocation5 + $0x34] sm:$0xf]
        %v447 = vld [vmem:[#allocation5 + $0x38] sm:$0xf]
        %v448 = vld [vmem:[#allocation5 + $0x3c] sm:$0xf]
        %v449 = vld [vmem:[%s2] sm:$0x1]
        %v451 = vlaneseq
        %v452 = vshrl.u32 %v451, 7
        %v453 = vsub.s32 0, %v452
        %v454 = vrot.slane %v449, %v453
        %v472 = vunpack.c.l.b16 %v433
        %v473 = vunpack.c.l.b16 %v434
        %v474 = vunpack.c.l.b16 %v435
        %v475 = vunpack.c.l.b16 %v436
        %v476 = vunpack.c.l.b16 %v437
        %v477 = vunpack.c.l.b16 %v438
        %v478 = vunpack.c.l.b16 %v439
        %v479 = vunpack.c.l.b16 %v440
        %v480 = vunpack.c.l.b16 %v441
        %v481 = vunpack.c.l.b16 %v442
        %v482 = vunpack.c.l.b16 %v443
        %v483 = vunpack.c.l.b16 %v444
        %v484 = vunpack.c.l.b16 %v445
        %v485 = vunpack.c.l.b16 %v446
        %v486 = vunpack.c.l.b16 %v447
        %v487 = vunpack.c.l.b16 %v448
        %v488 = vpack.c.b16 %v473, %v472
        %v489 = vpack.c.b16 %v475, %v474
        %v490 = vpack.c.b16 %v477, %v476
        %v491 = vpack.c.b16 %v479, %v478
        %v492 = vpack.c.b16 %v481, %v480
        %v493 = vpack.c.b16 %v483, %v482
        %v494 = vpack.c.b16 %v485, %v484
        %v495 = vpack.c.b16 %v487, %v486
        %504 = vmatprep.subr.bf16.mxu0 0
        %505 = vmatpush1.bf16.msra.mxu0 %v495
        %506 = vmatprep.subr.bf16.mxu0 0
        %507 = vmatpush1.bf16.msra.mxu0 %v494
        %508 = vmatprep.subr.bf16.mxu0 0
        %509 = vmatpush1.bf16.msra.mxu0 %v493
        %510 = vmatprep.subr.bf16.mxu0 0
        %511 = vmatpush1.bf16.msra.mxu0 %v492
        %512 = vmatprep.subr.bf16.mxu0 0
        %513 = vmatpush1.bf16.msra.mxu0 %v491
        %514 = vmatprep.subr.bf16.mxu0 0
        %515 = vmatpush1.bf16.msra.mxu0 %v490
        %516 = vmatprep.subr.bf16.mxu0 0
        %517 = vmatpush1.bf16.msra.mxu0 %v489
        %518 = vmatprep.subr.bf16.mxu0 0
        %519 = vmatpush1.bf16.msra.mxu0 %v488
        %520 = vmatprep.subr.bf16.mxu0 0
        %521 = vmatpush2.bf16.msra.mxu0 0
        %522 = vmatprep.subr.bf16.mxu0 0
        %523 = vmatpush2.bf16.msra.mxu0 0
        %524 = vmatprep.subr.bf16.mxu0 0
        %525 = vmatpush2.bf16.msra.mxu0 0
        %526 = vmatprep.subr.bf16.mxu0 0
        %527 = vmatpush2.bf16.msra.mxu0 0
        %528 = vmatprep.subr.bf16.mxu0 0
        %529 = vmatpush2.bf16.msra.mxu0 0
        %530 = vmatprep.subr.bf16.mxu0 0
        %531 = vmatpush2.bf16.msra.mxu0 0
        %532 = vmatprep.subr.bf16.mxu0 0
        %533 = vmatpush2.bf16.msra.mxu0 0
        %534 = vmatprep.subr.bf16.mxu0 0
        %535 = vmatpush2.bf16.msra.mxu0 0
        %536 = vmatprep.mubr.bf16.mxu0 0
        %537 = vmatmul.mubr.bf16.gmra.mxu0 %v432
        %v538 = vpop.f32.mrf.mxu0
        %v539 = vadd.f32 %v454, %v538
        %v540 = vpop.f32.mrf.mxu0
        %v541 = vpop.f32.mrf.mxu0
        %v542 = vpop.f32.mrf.mxu0
        %543 = vdwg.mxu0
        %v544 = vld [vmem:[#allocation7] sm:$0xf]
        %v545 = vld [vmem:[#allocation7 + $0x4] sm:$0xf]
        %v546 = vld [vmem:[#allocation7 + $0x8] sm:$0xf]
        %v547 = vld [vmem:[#allocation7 + $0xc] sm:$0xf]
        %v548 = vld [vmem:[#allocation7 + $0x10] sm:$0xf]
        %v549 = vld [vmem:[#allocation7 + $0x14] sm:$0xf]
        %v550 = vld [vmem:[#allocation7 + $0x18] sm:$0xf]
        %v551 = vld [vmem:[#allocation7 + $0x1c] sm:$0xf]
        %v552 = vld [vmem:[#allocation7 + $0x20] sm:$0xf]
        %v553 = vld [vmem:[#allocation7 + $0x24] sm:$0xf]
        %v554 = vld [vmem:[#allocation7 + $0x28] sm:$0xf]
        %v555 = vld [vmem:[#allocation7 + $0x2c] sm:$0xf]
        %v556 = vld [vmem:[#allocation7 + $0x30] sm:$0xf]
        %v557 = vld [vmem:[#allocation7 + $0x34] sm:$0xf]
        %v558 = vld [vmem:[#allocation7 + $0x38] sm:$0xf]
        %v559 = vld [vmem:[#allocation7 + $0x3c] sm:$0xf]
        %v560 = vld [vmem:[%s4] sm:$0x1]
        %v562 = vlaneseq
        %v563 = vshrl.u32 %v562, 7
        %v564 = vsub.s32 0, %v563
        %v565 = vrot.slane %v560, %v564
        %v583 = vunpack.c.l.b16 %v544
        %v584 = vunpack.c.l.b16 %v545
        %v585 = vunpack.c.l.b16 %v546
        %v586 = vunpack.c.l.b16 %v547
        %v587 = vunpack.c.l.b16 %v548
        %v588 = vunpack.c.l.b16 %v549
        %v589 = vunpack.c.l.b16 %v550
        %v590 = vunpack.c.l.b16 %v551
        %v591 = vunpack.c.l.b16 %v552
        %v592 = vunpack.c.l.b16 %v553
        %v593 = vunpack.c.l.b16 %v554
        %v594 = vunpack.c.l.b16 %v555
        %v595 = vunpack.c.l.b16 %v556
        %v596 = vunpack.c.l.b16 %v557
        %v597 = vunpack.c.l.b16 %v558
        %v598 = vunpack.c.l.b16 %v559
        %v599 = vpack.c.b16 %v584, %v583
        %v600 = vpack.c.b16 %v586, %v585
        %v601 = vpack.c.b16 %v588, %v587
        %v602 = vpack.c.b16 %v590, %v589
        %v603 = vpack.c.b16 %v592, %v591
        %v604 = vpack.c.b16 %v594, %v593
        %v605 = vpack.c.b16 %v596, %v595
        %v606 = vpack.c.b16 %v598, %v597
        %615 = vmatprep.subr.bf16.mxu0 0
        %616 = vmatpush1.bf16.msra.mxu0 %v606
        %617 = vmatprep.subr.bf16.mxu0 0
        %618 = vmatpush1.bf16.msra.mxu0 %v605
        %619 = vmatprep.subr.bf16.mxu0 0
        %620 = vmatpush1.bf16.msra.mxu0 %v604
        %621 = vmatprep.subr.bf16.mxu0 0
        %622 = vmatpush1.bf16.msra.mxu0 %v603
        %623 = vmatprep.subr.bf16.mxu0 0
        %624 = vmatpush1.bf16.msra.mxu0 %v602
        %625 = vmatprep.subr.bf16.mxu0 0
        %626 = vmatpush1.bf16.msra.mxu0 %v601
        %627 = vmatprep.subr.bf16.mxu0 0
        %628 = vmatpush1.bf16.msra.mxu0 %v600
        %629 = vmatprep.subr.bf16.mxu0 0
        %630 = vmatpush1.bf16.msra.mxu0 %v599
        %631 = vmatprep.subr.bf16.mxu0 0
        %632 = vmatpush2.bf16.msra.mxu0 0
        %633 = vmatprep.subr.bf16.mxu0 0
        %634 = vmatpush2.bf16.msra.mxu0 0
        %635 = vmatprep.subr.bf16.mxu0 0
        %636 = vmatpush2.bf16.msra.mxu0 0
        %637 = vmatprep.subr.bf16.mxu0 0
        %638 = vmatpush2.bf16.msra.mxu0 0
        %639 = vmatprep.subr.bf16.mxu0 0
        %640 = vmatpush2.bf16.msra.mxu0 0
        %641 = vmatprep.subr.bf16.mxu0 0
        %642 = vmatpush2.bf16.msra.mxu0 0
        %643 = vmatprep.subr.bf16.mxu0 0
        %644 = vmatpush2.bf16.msra.mxu0 0
        %645 = vmatprep.subr.bf16.mxu0 0
        %646 = vmatpush2.bf16.msra.mxu0 0
        %647 = vmatprep.mubr.bf16.mxu0 0
        %648 = vmatmul.mubr.bf16.gmra.mxu0 %v432
        %v649 = vpop.f32.mrf.mxu0
        %v650 = vadd.f32 %v565, %v649
        %v651 = vpop.f32.mrf.mxu0
        %v652 = vpop.f32.mrf.mxu0
        %v653 = vpop.f32.mrf.mxu0
        %654 = vdwg.mxu0
        %v655 = vld [vmem:[#allocation8] sm:$0xf]
        %v656 = vld [vmem:[#allocation8 + $0x4] sm:$0xf]
        %v657 = vld [vmem:[#allocation8 + $0x8] sm:$0xf]
        %v658 = vld [vmem:[#allocation8 + $0xc] sm:$0xf]
        %v659 = vld [vmem:[#allocation8 + $0x10] sm:$0xf]
        %v660 = vld [vmem:[#allocation8 + $0x14] sm:$0xf]
        %v661 = vld [vmem:[#allocation8 + $0x18] sm:$0xf]
        %v662 = vld [vmem:[#allocation8 + $0x1c] sm:$0xf]
        %v663 = vld [vmem:[#allocation8 + $0x20] sm:$0xf]
        %v664 = vld [vmem:[#allocation8 + $0x24] sm:$0xf]
        %v665 = vld [vmem:[#allocation8 + $0x28] sm:$0xf]
        %v666 = vld [vmem:[#allocation8 + $0x2c] sm:$0xf]
        %v667 = vld [vmem:[#allocation8 + $0x30] sm:$0xf]
        %v668 = vld [vmem:[#allocation8 + $0x34] sm:$0xf]
        %v669 = vld [vmem:[#allocation8 + $0x38] sm:$0xf]
        %v670 = vld [vmem:[#allocation8 + $0x3c] sm:$0xf]
        %v671 = vld [vmem:[%s6] sm:$0x1]
        %v673 = vlaneseq
        %v674 = vshrl.u32 %v673, 7
        %v675 = vsub.s32 0, %v674
        %v676 = vrot.slane %v671, %v675
        %v694 = vunpack.c.l.b16 %v655
        %v695 = vunpack.c.l.b16 %v656
        %v696 = vunpack.c.l.b16 %v657
        %v697 = vunpack.c.l.b16 %v658
        %v698 = vunpack.c.l.b16 %v659
        %v699 = vunpack.c.l.b16 %v660
        %v700 = vunpack.c.l.b16 %v661
        %v701 = vunpack.c.l.b16 %v662
        %v702 = vunpack.c.l.b16 %v663
        %v703 = vunpack.c.l.b16 %v664
        %v704 = vunpack.c.l.b16 %v665
        %v705 = vunpack.c.l.b16 %v666
        %v706 = vunpack.c.l.b16 %v667
        %v707 = vunpack.c.l.b16 %v668
        %v708 = vunpack.c.l.b16 %v669
        %v709 = vunpack.c.l.b16 %v670
        %v710 = vpack.c.b16 %v695, %v694
        %v711 = vpack.c.b16 %v697, %v696
        %v712 = vpack.c.b16 %v699, %v698
        %v713 = vpack.c.b16 %v701, %v700
        %v714 = vpack.c.b16 %v703, %v702
        %v715 = vpack.c.b16 %v705, %v704
        %v716 = vpack.c.b16 %v707, %v706
        %v717 = vpack.c.b16 %v709, %v708
        %726 = vmatprep.subr.bf16.mxu0 0
        %727 = vmatpush1.bf16.msra.mxu0 %v717
        %728 = vmatprep.subr.bf16.mxu0 0
        %729 = vmatpush1.bf16.msra.mxu0 %v716
        %730 = vmatprep.subr.bf16.mxu0 0
        %731 = vmatpush1.bf16.msra.mxu0 %v715
        %732 = vmatprep.subr.bf16.mxu0 0
        %733 = vmatpush1.bf16.msra.mxu0 %v714
        %734 = vmatprep.subr.bf16.mxu0 0
        %735 = vmatpush1.bf16.msra.mxu0 %v713
        %736 = vmatprep.subr.bf16.mxu0 0
        %737 = vmatpush1.bf16.msra.mxu0 %v712
        %738 = vmatprep.subr.bf16.mxu0 0
        %739 = vmatpush1.bf16.msra.mxu0 %v711
        %740 = vmatprep.subr.bf16.mxu0 0
        %741 = vmatpush1.bf16.msra.mxu0 %v710
        %742 = vmatprep.subr.bf16.mxu0 0
        %743 = vmatpush2.bf16.msra.mxu0 0
        %744 = vmatprep.subr.bf16.mxu0 0
        %745 = vmatpush2.bf16.msra.mxu0 0
        %746 = vmatprep.subr.bf16.mxu0 0
        %747 = vmatpush2.bf16.msra.mxu0 0
        %748 = vmatprep.subr.bf16.mxu0 0
        %749 = vmatpush2.bf16.msra.mxu0 0
        %750 = vmatprep.subr.bf16.mxu0 0
        %751 = vmatpush2.bf16.msra.mxu0 0
        %752 = vmatprep.subr.bf16.mxu0 0
        %753 = vmatpush2.bf16.msra.mxu0 0
        %754 = vmatprep.subr.bf16.mxu0 0
        %755 = vmatpush2.bf16.msra.mxu0 0
        %756 = vmatprep.subr.bf16.mxu0 0
        %757 = vmatpush2.bf16.msra.mxu0 0
        %758 = vmatprep.mubr.bf16.mxu0 0
        %759 = vmatmul.mubr.bf16.gmra.mxu0 %v432
        %v760 = vpop.f32.mrf.mxu0
        %v761 = vadd.f32 %v676, %v760
        %v762 = vpop.f32.mrf.mxu0
        %v763 = vpop.f32.mrf.mxu0
        %v764 = vpop.f32.mrf.mxu0
        %765 = vdwg.mxu0
        %v766 = vmul.f32 %v539, 0.17677669
        %v767 = vpack.c.bf16 %v766, %v766
        %768 = vst [vmem:[%s416] sm:$0xf] %v767
        %v769 = vpack.c.bf16 %v650, %v650
        %770 = vst [vmem:[%s423] sm:$0xf] %v769
        %v771 = vpack.c.bf16 %v761, %v761
        %772 = vst [vmem:[%s430] sm:$0xf] %v771
        %s773 = sand.u32 %s208, 1
        %s774 = scalar_lea.sflag [#allocation4], %s773
        %s775 = sand.u32 %s208, 1
        %s776 = smul.addr %s775, 4
        %s777 = scalar_lea.vmem [#allocation10], %s776
        %s778 = sand.u32 %s32, 1
        %s779 = scalar_lea.sflag [#allocation12], %s778
        %s780 = sand.u32 %s236, 1
        %s781 = smul.addr %s780, 4
        %s782 = scalar_lea.vmem [#allocation11], %s781
        %s783 = sand.u32 %s32, 1
        %s784 = scalar_lea.sflag [#allocation12], %s783
        %s785 = sand.u32 %s264, 1
        %s786 = smul.addr %s785, 4
        %s787 = scalar_lea.vmem [#allocation13], %s786
        // Predicated region
        $region65: #{tpu_custom_call.1} parent=47 // pred_check
          %p788 = pneg %p218
        $region66: #{tpu_custom_call.1} parent=47 // pred_check_branch
          %790 = sbr.rel (%p788) target = $region68
        $region67: #{tpu_custom_call.1} parent=47 // pred_region
          %s792 = ssub.s32 64, 64
          %793 = vsyncadd %s774, %s792
          %s794 = sadd.s32 %s37, %s36
          %s795 = smul.addr %s794, 64
          %s796 = scalar_lea.hbm %s7, %s795
          %s798 = sshll.u32 %s777, 4
          %s799 = int_to_ptr.vmem [resolvable:$true] %s798
          %801 = dma.vmem_to_hbm [thread:$0]  %s799, 64, %s796, %s774
        $region68: #{tpu_custom_call.1} parent=47 // pred_fallthru
          _
        // Predicated region
        $region69: #{tpu_custom_call.1} parent=47 // pred_check
          %p802 = pneg %p246
        $region70: #{tpu_custom_call.1} parent=47 // pred_check_branch
          %804 = sbr.rel (%p802) target = $region72
        $region71: #{tpu_custom_call.1} parent=47 // pred_region
          %s806 = ssub.s32 64, 64
          %807 = vsyncadd %s779, %s806
          %s808 = sadd.s32 %s37, %s36
          %s809 = smul.addr %s808, 64
          %s810 = scalar_lea.hbm %s8, %s809
          %s812 = sshll.u32 %s782, 4
          %s813 = int_to_ptr.vmem [resolvable:$true] %s812
          %815 = dma.vmem_to_hbm [thread:$0]  %s813, 64, %s810, %s779
        $region72: #{tpu_custom_call.1} parent=47 // pred_fallthru
          _
        // Predicated region
        $region73: #{tpu_custom_call.1} parent=47 // pred_check
          %p816 = pneg %p274
        $region74: #{tpu_custom_call.1} parent=47 // pred_check_branch
          %818 = sbr.rel (%p816) target = $region76
        $region75: #{tpu_custom_call.1} parent=47 // pred_region
          %s820 = ssub.s32 64, 64
          %821 = vsyncadd %s784, %s820
          %s822 = sadd.s32 %s37, %s36
          %s823 = smul.addr %s822, 64
          %s824 = scalar_lea.hbm %s9, %s823
          %s826 = sshll.u32 %s787, 4
          %s827 = int_to_ptr.vmem [resolvable:$true] %s826
          %829 = dma.vmem_to_hbm [thread:$0]  %s827, 64, %s824, %s784
        $region76: #{tpu_custom_call.1} parent=47 // pred_fallthru
          _
      $region48: #{tpu_custom_call.1} parent=5 // pred_fallthru
        _
      %p830 = scmp.le.s32.totalorder 2, %s27
      // Predicated region
      $region77: #{tpu_custom_call.1} parent=5 // pred_check
        %p831 = pneg %p830
      $region78: #{tpu_custom_call.1} parent=5 // pred_check_branch
        %833 = sbr.rel (%p831) target = $region80
      $region79: #{tpu_custom_call.1} parent=5 // pred_region
        %s834 = ssub.s32 %s27, 2
        // Predicated region
        $region81: #{tpu_custom_call.1} parent=79 // pred_check
          %p835 = pneg %p224
        $region82: #{tpu_custom_call.1} parent=79 // pred_check_branch
          %837 = sbr.rel (%p835) target = $region84
        $region83: #{tpu_custom_call.1} parent=79 // pred_region
          %s838 = sand.u32 %s209, 1
          %s839 = scalar_lea.sflag [#allocation4], %s838
          %s840 = sand.u32 %s209, 1
          %s841 = smul.addr %s840, 4
          %s842 = scalar_lea.vmem [#allocation10], %s841
          %843 = dma.done %s839, 64
        $region84: #{tpu_custom_call.1} parent=79 // pred_fallthru
          _
        // Predicated region
        $region85: #{tpu_custom_call.1} parent=79 // pred_check
          %p844 = pneg %p252
        $region86: #{tpu_custom_call.1} parent=79 // pred_check_branch
          %846 = sbr.rel (%p844) target = $region88
        $region87: #{tpu_custom_call.1} parent=79 // pred_region
          %s847 = sand.u32 %s33, 1
          %s848 = scalar_lea.sflag [#allocation12], %s847
          %s849 = sand.u32 %s237, 1
          %s850 = smul.addr %s849, 4
          %s851 = scalar_lea.vmem [#allocation11], %s850
          %852 = dma.done %s848, 64
        $region88: #{tpu_custom_call.1} parent=79 // pred_fallthru
          _
        // Predicated region
        $region89: #{tpu_custom_call.1} parent=79 // pred_check
          %p853 = pneg %p280
        $region90: #{tpu_custom_call.1} parent=79 // pred_check_branch
          %855 = sbr.rel (%p853) target = $region92
        $region91: #{tpu_custom_call.1} parent=79 // pred_region
          %s856 = sand.u32 %s33, 1
          %s857 = scalar_lea.sflag [#allocation12], %s856
          %s858 = sand.u32 %s265, 1
          %s859 = smul.addr %s858, 4
          %s860 = scalar_lea.vmem [#allocation13], %s859
          %861 = dma.done %s857, 64
        $region92: #{tpu_custom_call.1} parent=79 // pred_fallthru
          _
      $region80: #{tpu_custom_call.1} parent=5 // pred_fallthru
        _
    $region6: #{tpu_custom_call.1} parent=1 // loop_footer
      %s31 = sadd.s32 1, %s27
    $region7: #{tpu_custom_call.1} parent=1 // loop_footer_branch
      %26 = sbr.rel target = $region3
    $region8: #{tpu_custom_call.1} parent=1 // loop_exit
      _
    %862 = vsyncpa [#allocation3], 1
    %s863 = scalar_lea.sflag [#allocation3], 1
    %864 = vsyncpa %s863, 1
    %865 = vsyncpa [#allocation6], 1
    %866 = vsyncpa [#allocation9], 1
    %867 = vsyncpa [#allocation4], 1
    %s868 = scalar_lea.sflag [#allocation4], 1
    %869 = vsyncpa %s868, 1
    %870 = vsyncpa [#allocation12], 1
    %s871 = scalar_lea.sflag [#allocation12], 1
    %872 = vsyncpa %s871, 1

// kernel: tpu_custom_call.1
$region0: #{tpu_custom_call.1}
  #allocation0 [shape = 'u32[]', space=smem, size = 0x4, offset = 0x4, fixed_abs, tag = 'smem constant byte address 0x4 - core index']
  #allocation1 [shape = 'u32[144,128]{1,0:T(1,128)}', space=vmem, size = 0x12000, scoped, tag = 'internal scratch']
  %s0 = inlined_call_operand.hbm [shape: bf16[2,8,128], index: 0, kind: input, shape index: {}]
  %s1 = inlined_call_operand.hbm [shape: bf16[128,128], index: 1, kind: input, shape index: {}]
  %s2 = inlined_call_operand.vmem [shape: f32[1,128], index: 2, kind: input, shape index: {}]
  %s3 = inlined_call_operand.hbm [shape: bf16[128,128], index: 3, kind: input, shape index: {}]
  %s4 = inlined_call_operand.vmem [shape: f32[1,128], index: 4, kind: input, shape index: {}]
  %s5 = inlined_call_operand.hbm [shape: bf16[128,128], index: 5, kind: input, shape index: {}]
  %s6 = inlined_call_operand.vmem [shape: f32[1,128], index: 6, kind: input, shape index: {}]
  %s7 = inlined_call_operand.hbm [shape: bf16[2,8,128], index: 7, kind: output, shape index: {0}]
  %s8 = inlined_call_operand.hbm [shape: bf16[2,8,128], index: 8, kind: output, shape index: {1}]
  %s9 = inlined_call_operand.hbm [shape: bf16[2,8,128], index: 9, kind: output, shape index: {2}]
  %10 = xla_tuple %s7, %s8, %s9
  %s11 = sld [smem:[#allocation0]]
  $region93: #{tpu_custom_call.1} parent=0
    _
  %s13 = ssub.s32 1, %s11
  %s14 = scalar_select 0, %s13, %s11
  $region1: #{tpu_custom_call.1} parent=0
    #allocation2 [shape = 'u8[4096]{0}', space=vmem, size = 0x1000, scoped, tag = 'input window, operand 0']
    #allocation3 [shape = 's32[2]{0}', space=sflag, size = 0x8, scoped, tag = 'scoped memory for tpu_custom_call.1']
    #allocation4 [shape = 's32[2]{0}', space=sflag, size = 0x8, scoped, tag = 'scoped memory for tpu_custom_call.1']
    #allocation5 [shape = 'u8[32768]{0}', space=vmem, size = 0x8000, scoped, tag = 'input window, operand 1, single buffered']
    #allocation6 [shape = 's32[1]{0}', space=sflag, size = 0x4, scoped, tag = 'scoped memory for tpu_custom_call.1']
    #allocation7 [shape = 'u8[32768]{0}', space=vmem, size = 0x8000, scoped, tag = 'input window, operand 3, single buffered']
    #allocation8 [shape = 'u8[32768]{0}', space=vmem, size = 0x8000, scoped, tag = 'input window, operand 5, single buffered']
    #allocation9 [shape = 's32[1]{0}', space=sflag, size = 0x4, scoped, tag = 'scoped memory for tpu_custom_call.1']
    #allocation10 [shape = 'u8[4096]{0}', space=vmem, size = 0x1000, scoped, tag = 'output window, operand 0']
    #allocation11 [shape = 'u8[4096]{0}', space=vmem, size = 0x1000, scoped, tag = 'output window, operand 1']
    #allocation12 [shape = 's32[2]{0}', space=sflag, size = 0x8, scoped, tag = 'scoped memory for tpu_custom_call.1']
    #allocation13 [shape = 'u8[4096]{0}', space=vmem, size = 0x1000, scoped, tag = 'output window, operand 2']
    %15 = vsyncpa [#allocation3], 0
    %s16 = scalar_lea.sflag [#allocation3], 1
    %17 = vsyncpa %s16, 0
    %18 = vsyncpa [#allocation6], 0
    %19 = vsyncpa [#allocation9], 0
    %20 = vsyncpa [#allocation4], 0
    %s21 = scalar_lea.sflag [#allocation4], 1
    %22 = vsyncpa %s21, 0
    %23 = vsyncpa [#allocation12], 0
    %s24 = scalar_lea.sflag [#allocation12], 1
    %25 = vsyncpa %s24, 0
    loop: start=0, step=1, limit=4
    $region2: #{tpu_custom_call.1} parent=1 // loop_pre_header
      _
    $region3: #{tpu_custom_call.1} parent=1 // loop_header
      %s27 = sphi 0, %s31
      %p28 = scmp.ge.s32.totalorder %s27, 4
      %s34 = sphi 0, %s46
      %s35 = sphi 0, %s42
      %s36 = sphi 0, %s34
      %s37 = sphi 0, %s35
      %s38 = sphi 0, %s36
      %s39 = sphi 0, %s37
      %s51 = sphi 0, %s53
      %s54 = sphi 0, %s51
      %s55 = sphi 0, %s54
      %s71 = sphi 0, %s55
      %s75 = sphi 0, %s75
      %s77 = sphi 0, %s75
      %s78 = sphi 0, %s77
      %s92 = sphi 0, %s78
      %s96 = sphi 0, %s96
      %s98 = sphi 0, %s96
      %s99 = sphi 0, %s98
      %s113 = sphi 0, %s99
      %s117 = sphi 0, %s117
      %s119 = sphi 0, %s117
      %s120 = sphi 0, %s119
      %s134 = sphi 0, %s120
      %s138 = sphi 0, %s138
      %s140 = sphi 0, %s138
      %s141 = sphi 0, %s140
      %s155 = sphi 0, %s141
      %s159 = sphi 0, %s159
      %s161 = sphi 0, %s159
      %s162 = sphi 0, %s161
      %s176 = sphi 0, %s162
      %s180 = sphi 0, %s180
      %s182 = sphi 0, %s180
      %s183 = sphi 0, %s182
      %s197 = sphi 0, %s183
      %s205 = sphi 0, %s207
      %s208 = sphi 0, %s205
      %s209 = sphi 0, %s208
      %s225 = sphi 0, %s209
      %s233 = sphi 0, %s235
      %s236 = sphi 0, %s233
      %s237 = sphi 0, %s236
      %s253 = sphi 0, %s237
      %s261 = sphi 0, %s263
      %s264 = sphi 0, %s261
      %s265 = sphi 0, %s264
      %s281 = sphi 0, %s265
    $region4: #{tpu_custom_call.1} parent=1 // loop_header_branch
      %30 = sbr.rel (%p28) target = $region8
    $region5: #{tpu_custom_call.1} parent=1 // loop_body
      %s32 = ssub.s32 %s27, 1
      %s33 = ssub.s32 %s27, 2
      %s40 = sadd.s32 1, %s35
      %p41 = scmp.ge.s32.totalorder %s40, 1
      %s42 = scalar_select %p41, 0, %s40
      %s43 = sadd.s32 1, %s34
      %s44 = scalar_select %p41, %s43, %s34
      %p45 = scmp.ge.s32.totalorder %s44, 2
      %s46 = scalar_select %p45, 0, %s44
      %s47 = ssub.s32 %s34, %s46
      %s48 = ssub.s32 %s35, %s42
      %s49 = sor.u32 %s47, %s48
      %p50 = scmp.eq.s32.totalorder %s49, 0
      %s52 = sadd.s32 %s51, 1
      %s53 = scalar_select %p50, %s51, %s52
      %p56 = pneg %p50
      %p57 = scmp.eq.s32.totalorder %s27, 1
      %p58 = por %p56, %p57
      %p59 = scmp.ne.s32.totalorder %s51, %s54
      %p60 = scmp.eq.s32.totalorder %s27, 0
      %p61 = por %p59, %p60
      %p62 = scmp.ne.s32.totalorder %s51, %s54
      %p63 = scmp.eq.s32.totalorder %s32, 1
      %p64 = por %p62, %p63
      %p65 = scmp.ne.s32.totalorder %s54, %s55
      %p66 = scmp.eq.s32.totalorder %s32, 0
      %p67 = por %p65, %p66
      %p68 = scmp.ne.s32.totalorder %s54, %s55
      %p69 = scmp.eq.s32.totalorder %s33, 1
      %p70 = por %p68, %p69
      %p72 = scmp.ne.s32.totalorder %s55, %s71
      %p73 = scmp.eq.s32.totalorder %s33, 0
      %p74 = por %p72, %p73
      %s76 = sadd.s32 %s75, 1
      %p79 = scmp.eq.s32.totalorder %s27, 1
      %p80 = scmp.ne.s32.totalorder %s75, %s77
      %p81 = scmp.eq.s32.totalorder %s27, 0
      %p82 = por %p80, %p81
      %p83 = scmp.ne.s32.totalorder %s75, %s77
      %p84 = scmp.eq.s32.totalorder %s32, 1
      %p85 = por %p83, %p84
      %p86 = scmp.ne.s32.totalorder %s77, %s78
      %p87 = scmp.eq.s32.totalorder %s32, 0
      %p88 = por %p86, %p87
      %p89 = scmp.ne.s32.totalorder %s77, %s78
      %p90 = scmp.eq.s32.totalorder %s33, 1
      %p91 = por %p89, %p90
      %p93 = scmp.ne.s32.totalorder %s78, %s92
      %p94 = scmp.eq.s32.totalorder %s33, 0
      %p95 = por %p93, %p94
      %s97 = sadd.s32 %s96, 1
      %p100 = scmp.eq.s32.totalorder %s27, 1
      %p101 = scmp.ne.s32.totalorder %s96, %s98
      %p102 = scmp.eq.s32.totalorder %s27, 0
      %p103 = por %p101, %p102
      %p104 = scmp.ne.s32.totalorder %s96, %s98
      %p105 = scmp.eq.s32.totalorder %s32, 1
      %p106 = por %p104, %p105
      %p107 = scmp.ne.s32.totalorder %s98, %s99
      %p108 = scmp.eq.s32.totalorder %s32, 0
      %p109 = por %p107, %p108
      %p110 = scmp.ne.s32.totalorder %s98, %s99
      %p111 = scmp.eq.s32.totalorder %s33, 1
      %p112 = por %p110, %p111
      %p114 = scmp.ne.s32.totalorder %s99, %s113
      %p115 = scmp.eq.s32.totalorder %s33, 0
      %p116 = por %p114, %p115
      %s118 = sadd.s32 %s117, 1
      %p121 = scmp.eq.s32.totalorder %s27, 1
      %p122 = scmp.ne.s32.totalorder %s117, %s119
      %p123 = scmp.eq.s32.totalorder %s27, 0
      %p124 = por %p122, %p123
      %p125 = scmp.ne.s32.totalorder %s117, %s119
      %p126 = scmp.eq.s32.totalorder %s32, 1
      %p127 = por %p125, %p126
      %p128 = scmp.ne.s32.totalorder %s119, %s120
      %p129 = scmp.eq.s32.totalorder %s32, 0
      %p130 = por %p128, %p129
      %p131 = scmp.ne.s32.totalorder %s119, %s120
      %p132 = scmp.eq.s32.totalorder %s33, 1
      %p133 = por %p131, %p132
      %p135 = scmp.ne.s32.totalorder %s120, %s134
      %p136 = scmp.eq.s32.totalorder %s33, 0
      %p137 = por %p135, %p136
      %s139 = sadd.s32 %s138, 1
      %p142 = scmp.eq.s32.totalorder %s27, 1
      %p143 = scmp.ne.s32.totalorder %s138, %s140
      %p144 = scmp.eq.s32.totalorder %s27, 0
      %p145 = por %p143, %p144
      %p146 = scmp.ne.s32.totalorder %s138, %s140
      %p147 = scmp.eq.s32.totalorder %s32, 1
      %p148 = por %p146, %p147
      %p149 = scmp.ne.s32.totalorder %s140, %s141
      %p150 = scmp.eq.s32.totalorder %s32, 0
      %p151 = por %p149, %p150
      %p152 = scmp.ne.s32.totalorder %s140, %s141
      %p153 = scmp.eq.s32.totalorder %s33, 1
      %p154 = por %p152, %p153
      %p156 = scmp.ne.s32.totalorder %s141, %s155
      %p157 = scmp.eq.s32.totalorder %s33, 0
      %p158 = por %p156, %p157
      %s160 = sadd.s32 %s159, 1
      %p163 = scmp.eq.s32.totalorder %s27, 1
      %p164 = scmp.ne.s32.totalorder %s159, %s161
      %p165 = scmp.eq.s32.totalorder %s27, 0
      %p166 = por %p164, %p165
      %p167 = scmp.ne.s32.totalorder %s159, %s161
      %p168 = scmp.eq.s32.totalorder %s32, 1
      %p169 = por %p167, %p168
      %p170 = scmp.ne.s32.totalorder %s161, %s162
      %p171 = scmp.eq.s32.totalorder %s32, 0
      %p172 = por %p170, %p171
      %p173 = scmp.ne.s32.totalorder %s161, %s162
      %p174 = scmp.eq.s32.totalorder %s33, 1
      %p175 = por %p173, %p174
      %p177 = scmp.ne.s32.totalorder %s162, %s176
      %p178 = scmp.eq.s32.totalorder %s33, 0
      %p179 = por %p177, %p178
      %s181 = sadd.s32 %s180, 1
      %p184 = scmp.eq.s32.totalorder %s27, 1
      %p185 = scmp.ne.s32.totalorder %s180, %s182
      %p186 = scmp.eq.s32.totalorder %s27, 0
      %p187 = por %p185, %p186
      %p188 = scmp.ne.s32.totalorder %s180, %s182
      %p189 = scmp.eq.s32.totalorder %s32, 1
      %p190 = por %p188, %p189
      %p191 = scmp.ne.s32.totalorder %s182, %s183
      %p192 = scmp.eq.s32.totalorder %s32, 0
      %p193 = por %p191, %p192
      %p194 = scmp.ne.s32.totalorder %s182, %s183
      %p195 = scmp.eq.s32.totalorder %s33, 1
      %p196 = por %p194, %p195
      %p198 = scmp.ne.s32.totalorder %s183, %s197
      %p199 = scmp.eq.s32.totalorder %s33, 0
      %p200 = por %p198, %p199
      %s201 = ssub.s32 %s34, %s46
      %s202 = ssub.s32 %s35, %s42
      %s203 = sor.u32 %s201, %s202
      %p204 = scmp.eq.s32.totalorder %s203, 0
      %s206 = sadd.s32 %s205, 1
      %s207 = scalar_select %p204, %s205, %s206
      %p210 = pneg %p204
      %p211 = scmp.eq.s32.totalorder %s27, 1
      %p212 = por %p210, %p211
      %p213 = scmp.ne.s32.totalorder %s205, %s208
      %p214 = scmp.eq.s32.totalorder %s27, 0
      %p215 = por %p213, %p214
      %p216 = scmp.ne.s32.totalorder %s205, %s208
      %p217 = scmp.eq.s32.totalorder %s32, 1
      %p218 = por %p216, %p217
      %p219 = scmp.ne.s32.totalorder %s208, %s209
      %p220 = scmp.eq.s32.totalorder %s32, 0
      %p221 = por %p219, %p220
      %p222 = scmp.ne.s32.totalorder %s208, %s209
      %p223 = scmp.eq.s32.totalorder %s33, 1
      %p224 = por %p222, %p223
      %p226 = scmp.ne.s32.totalorder %s209, %s225
      %p227 = scmp.eq.s32.totalorder %s33, 0
      %p228 = por %p226, %p227
      %s229 = ssub.s32 %s34, %s46
      %s230 = ssub.s32 %s35, %s42
      %s231 = sor.u32 %s229, %s230
      %p232 = scmp.eq.s32.totalorder %s231, 0
      %s234 = sadd.s32 %s233, 1
      %s235 = scalar_select %p232, %s233, %s234
      %p238 = pneg %p232
      %p239 = scmp.eq.s32.totalorder %s27, 1
      %p240 = por %p238, %p239
      %p241 = scmp.ne.s32.totalorder %s233, %s236
      %p242 = scmp.eq.s32.totalorder %s27, 0
      %p243 = por %p241, %p242
      %p244 = scmp.ne.s32.totalorder %s233, %s236
      %p245 = scmp.eq.s32.totalorder %s32, 1
      %p246 = por %p244, %p245
      %p247 = scmp.ne.s32.totalorder %s236, %s237
      %p248 = scmp.eq.s32.totalorder %s32, 0
      %p249 = por %p247, %p248
      %p250 = scmp.ne.s32.totalorder %s236, %s237
      %p251 = scmp.eq.s32.totalorder %s33, 1
      %p252 = por %p250, %p251
      %p254 = scmp.ne.s32.totalorder %s237, %s253
      %p255 = scmp.eq.s32.totalorder %s33, 0
      %p256 = por %p254, %p255
      %s257 = ssub.s32 %s34, %s46
      %s258 = ssub.s32 %s35, %s42
      %s259 = sor.u32 %s257, %s258
      %p260 = scmp.eq.s32.totalorder %s259, 0
      %s262 = sadd.s32 %s261, 1
      %s263 = scalar_select %p260, %s261, %s262
      %p266 = pneg %p260
      %p267 = scmp.eq.s32.totalorder %s27, 1
      %p268 = por %p266, %p267
      %p269 = scmp.ne.s32.totalorder %s261, %s264
      %p270 = scmp.eq.s32.totalorder %s27, 0
      %p271 = por %p269, %p270
      %p272 = scmp.ne.s32.totalorder %s261, %s264
      %p273 = scmp.eq.s32.totalorder %s32, 1
      %p274 = por %p272, %p273
      %p275 = scmp.ne.s32.totalorder %s264, %s265
      %p276 = scmp.eq.s32.totalorder %s32, 0
      %p277 = por %p275, %p276
      %p278 = scmp.ne.s32.totalorder %s264, %s265
      %p279 = scmp.eq.s32.totalorder %s33, 1
      %p280 = por %p278, %p279
      %p282 = scmp.ne.s32.totalorder %s265, %s281
      %p283 = scmp.eq.s32.totalorder %s33, 0
      %p284 = por %p282, %p283
      %p285 = scmp.le.s32.totalorder 1, %s27
      %p286 = scmp.lt.s32.totalorder %s27, 3
      %p287 = pnand %p285, %p286
      %p288 = pneg %p287
      // Predicated region
      $region9: #{tpu_custom_call.1} parent=5 // pred_check
        _
      $region10: #{tpu_custom_call.1} parent=5 // pred_check_branch
        %290 = sbr.rel (%p287) target = $region12
      $region11: #{tpu_custom_call.1} parent=5 // pred_region
        %s291 = ssub.s32 %s27, 1
        // Predicated region
        $region13: #{tpu_custom_call.1} parent=11 // pred_check
          %p292 = pneg %p88
        $region14: #{tpu_custom_call.1} parent=11 // pred_check_branch
          %294 = sbr.rel (%p292) target = $region16
        $region15: #{tpu_custom_call.1} parent=11 // pred_region
          %s296 = ssub.s32 1024, 1024
          %297 = vsyncadd [#allocation6], %s296
          %s298 = sshll.u32 [#allocation5], 4
          %s299 = int_to_ptr.vmem [resolvable:$true] %s298
          %304 = dma.hbm_to_vmem [thread:$0]  %s1, 1024, %s299, [#allocation6], 64, 64, 4
        $region16: #{tpu_custom_call.1} parent=11 // pred_fallthru
          _
        // Predicated region
        $region17: #{tpu_custom_call.1} parent=11 // pred_check
          %p305 = pneg %p109
        $region18: #{tpu_custom_call.1} parent=11 // pred_check_branch
          %307 = sbr.rel (%p305) target = $region20
        $region19: #{tpu_custom_call.1} parent=11 // pred_region
          _
        $region20: #{tpu_custom_call.1} parent=11 // pred_fallthru
          _
        // Predicated region
        $region21: #{tpu_custom_call.1} parent=11 // pred_check
          %p308 = pneg %p130
        $region22: #{tpu_custom_call.1} parent=11 // pred_check_branch
          %310 = sbr.rel (%p308) target = $region24
        $region23: #{tpu_custom_call.1} parent=11 // pred_region
          %s312 = ssub.s32 1024, 1024
          %313 = vsyncadd [#allocation6], %s312
          %s314 = sshll.u32 [#allocation7], 4
          %s315 = int_to_ptr.vmem [resolvable:$true] %s314
          %320 = dma.hbm_to_vmem [thread:$0]  %s3, 1024, %s315, [#allocation6], 64, 64, 4
        $region24: #{tpu_custom_call.1} parent=11 // pred_fallthru
          _
        // Predicated region
        $region25: #{tpu_custom_call.1} parent=11 // pred_check
          %p321 = pneg %p151
        $region26: #{tpu_custom_call.1} parent=11 // pred_check_branch
          %323 = sbr.rel (%p321) target = $region28
        $region27: #{tpu_custom_call.1} parent=11 // pred_region
          _
        $region28: #{tpu_custom_call.1} parent=11 // pred_fallthru
          _
        // Predicated region
        $region29: #{tpu_custom_call.1} parent=11 // pred_check
          %p324 = pneg %p172
        $region30: #{tpu_custom_call.1} parent=11 // pred_check_branch
          %326 = sbr.rel (%p324) target = $region32
        $region31: #{tpu_custom_call.1} parent=11 // pred_region
          %s328 = ssub.s32 1024, 1024
          %329 = vsyncadd [#allocation9], %s328
          %s330 = sshll.u32 [#allocation8], 4
          %s331 = int_to_ptr.vmem [resolvable:$true] %s330
          %336 = dma.hbm_to_vmem [thread:$0]  %s5, 1024, %s331, [#allocation9], 64, 64, 4
        $region32: #{tpu_custom_call.1} parent=11 // pred_fallthru
          _
        // Predicated region
        $region33: #{tpu_custom_call.1} parent=11 // pred_check
          %p337 = pneg %p193
        $region34: #{tpu_custom_call.1} parent=11 // pred_check_branch
          %339 = sbr.rel (%p337) target = $region36
        $region35: #{tpu_custom_call.1} parent=11 // pred_region
          _
        $region36: #{tpu_custom_call.1} parent=11 // pred_fallthru
          _
      $region12: #{tpu_custom_call.1} parent=5 // pred_fallthru
        _
      %p340 = scmp.lt.s32.totalorder %s27, 2
      // Predicated region
      $region37: #{tpu_custom_call.1} parent=5 // pred_check
        %p341 = pneg %p340
      $region38: #{tpu_custom_call.1} parent=5 // pred_check_branch
        %343 = sbr.rel (%p341) target = $region40
      $region39: #{tpu_custom_call.1} parent=5 // pred_region
        // Predicated region
        $region41: #{tpu_custom_call.1} parent=39 // pred_check
          %p344 = pneg %p61
        $region42: #{tpu_custom_call.1} parent=39 // pred_check_branch
          %346 = sbr.rel (%p344) target = $region44
        $region43: #{tpu_custom_call.1} parent=39 // pred_region
          %s347 = sand.u32 %s51, 1
          %s348 = scalar_lea.sflag [#allocation3], %s347
          %s349 = sand.u32 %s51, 1
          %s350 = smul.addr %s349, 4
          %s351 = scalar_lea.vmem [#allocation2], %s350
          %s353 = ssub.s32 64, 64
          %354 = vsyncadd %s348, %s353
          %s355 = sadd.s32 %s35, %s34
          %s356 = smul.addr %s355, 64
          %s357 = scalar_lea.hbm %s0, %s356
          %s359 = sshll.u32 %s351, 4
          %s360 = int_to_ptr.vmem [resolvable:$true] %s359
          %362 = dma.hbm_to_vmem [thread:$0]  %s357, 64, %s360, %s348
        $region44: #{tpu_custom_call.1} parent=39 // pred_fallthru
          _
      $region40: #{tpu_custom_call.1} parent=5 // pred_fallthru
        _
      %p363 = scmp.le.s32.totalorder 1, %s27
      %p364 = scmp.lt.s32.totalorder %s27, 3
      %p365 = pnand %p363, %p364
      %p366 = pneg %p365
      // Predicated region
      $region45: #{tpu_custom_call.1} parent=5 // pred_check
        _
      $region46: #{tpu_custom_call.1} parent=5 // pred_check_branch
        %368 = sbr.rel (%p365) target = $region48
      $region47: #{tpu_custom_call.1} parent=5 // pred_region
        %s369 = ssub.s32 %s27, 1
        %s370 = sand.u32 %s54, 1
        %s371 = scalar_lea.sflag [#allocation3], %s370
        %s372 = sand.u32 %s54, 1
        %s373 = smul.addr %s372, 4
        %s374 = scalar_lea.vmem [#allocation2], %s373
        // Predicated region
        $region49: #{tpu_custom_call.1} parent=47 // pred_check
          %p375 = pneg %p67
        $region50: #{tpu_custom_call.1} parent=47 // pred_check_branch
          %377 = sbr.rel (%p375) target = $region52
        $region51: #{tpu_custom_call.1} parent=47 // pred_region
          %378 = dma.done %s371, 64
        $region52: #{tpu_custom_call.1} parent=47 // pred_fallthru
          _
        // Predicated region
        $region53: #{tpu_custom_call.1} parent=47 // pred_check
          %p379 = pneg %p88
        $region54: #{tpu_custom_call.1} parent=47 // pred_check_branch
          %381 = sbr.rel (%p379) target = $region56
        $region55: #{tpu_custom_call.1} parent=47 // pred_region
          %382 = dma.done [#allocation6], 1024
        $region56: #{tpu_custom_call.1} parent=47 // pred_fallthru
          _
        // Predicated region
        $region57: #{tpu_custom_call.1} parent=47 // pred_check
          %p383 = pneg %p130
        $region58: #{tpu_custom_call.1} parent=47 // pred_check_branch
          %385 = sbr.rel (%p383) target = $region60
        $region59: #{tpu_custom_call.1} parent=47 // pred_region
          %386 = dma.done [#allocation6], 1024
        $region60: #{tpu_custom_call.1} parent=47 // pred_fallthru
          _
        // Predicated region
        $region61: #{tpu_custom_call.1} parent=47 // pred_check
          %p387 = pneg %p172
        $region62: #{tpu_custom_call.1} parent=47 // pred_check_branch
          %389 = sbr.rel (%p387) target = $region64
        $region63: #{tpu_custom_call.1} parent=47 // pred_region
          %390 = dma.done [#allocation9], 1024
        $region64: #{tpu_custom_call.1} parent=47 // pred_fallthru
          _
        %s391 = sand.u32 %s54, 1
        %s392 = scalar_lea.sflag [#allocation3], %s391
        %s393 = sand.u32 %s54, 1
        %s394 = smul.addr %s393, 4
        %s395 = scalar_lea.vmem [#allocation2], %s394
        %p396 = pneg %p67
        %p397 = pneg %p64
        %p398 = pneg %p88
        %p399 = pneg %p85
        %p400 = pneg %p109
        %p401 = pneg %p106
        %p402 = pneg %p130
        %p403 = pneg %p127
        %p404 = pneg %p151
        %p405 = pneg %p148
        %p406 = pneg %p172
        %p407 = pneg %p169
        %p408 = pneg %p193
        %p409 = pneg %p190
        %p410 = pneg %p221
        %p411 = pneg %p218
        %s412 = sand.u32 %s208, 1
        %s413 = scalar_lea.sflag [#allocation4], %s412
        %s414 = sand.u32 %s208, 1
        %s415 = smul.addr %s414, 4
        %s416 = scalar_lea.vmem [#allocation10], %s415
        %p417 = pneg %p249
        %p418 = pneg %p246
        %s419 = sand.u32 %s32, 1
        %s420 = scalar_lea.sflag [#allocation12], %s419
        %s421 = sand.u32 %s236, 1
        %s422 = smul.addr %s421, 4
        %s423 = scalar_lea.vmem [#allocation11], %s422
        %p424 = pneg %p277
        %p425 = pneg %p274
        %s426 = sand.u32 %s32, 1
        %s427 = scalar_lea.sflag [#allocation12], %s426
        %s428 = sand.u32 %s264, 1
        %s429 = smul.addr %s428, 4
        %s430 = scalar_lea.vmem [#allocation13], %s429
        %v432 = vld [vmem:[%s374] sm:$0xf]
        %v433 = vld [vmem:[#allocation5] sm:$0xf]
        %v434 = vld [vmem:[#allocation5 + $0x4] sm:$0xf]
        %v435 = vld [vmem:[#allocation5 + $0x8] sm:$0xf]
        %v436 = vld [vmem:[#allocation5 + $0xc] sm:$0xf]
        %v437 = vld [vmem:[#allocation5 + $0x10] sm:$0xf]
        %v438 = vld [vmem:[#allocation5 + $0x14] sm:$0xf]
        %v439 = vld [vmem:[#allocation5 + $0x18] sm:$0xf]
        %v440 = vld [vmem:[#allocation5 + $0x1c] sm:$0xf]
        %v441 = vld [vmem:[#allocation5 + $0x20] sm:$0xf]
        %v442 = vld [vmem:[#allocation5 + $0x24] sm:$0xf]
        %v443 = vld [vmem:[#allocation5 + $0x28] sm:$0xf]
        %v444 = vld [vmem:[#allocation5 + $0x2c] sm:$0xf]
        %v445 = vld [vmem:[#allocation5 + $0x30] sm:$0xf]
        %v446 = vld [vmem:[#allocation5 + $0x34] sm:$0xf]
        %v447 = vld [vmem:[#allocation5 + $0x38] sm:$0xf]
        %v448 = vld [vmem:[#allocation5 + $0x3c] sm:$0xf]
        %v449 = vld [vmem:[%s2] sm:$0x1]
        %v451 = vlaneseq
        %v452 = vshrl.u32 %v451, 7
        %v453 = vsub.s32 0, %v452
        %v454 = vrot.slane %v449, %v453
        %v472 = vunpack.c.l.b16 %v433
        %v473 = vunpack.c.l.b16 %v434
        %v474 = vunpack.c.l.b16 %v435
        %v475 = vunpack.c.l.b16 %v436
        %v476 = vunpack.c.l.b16 %v437
        %v477 = vunpack.c.l.b16 %v438
        %v478 = vunpack.c.l.b16 %v439
        %v479 = vunpack.c.l.b16 %v440
        %v480 = vunpack.c.l.b16 %v441
        %v481 = vunpack.c.l.b16 %v442
        %v482 = vunpack.c.l.b16 %v443
        %v483 = vunpack.c.l.b16 %v444
        %v484 = vunpack.c.l.b16 %v445
        %v485 = vunpack.c.l.b16 %v446
        %v486 = vunpack.c.l.b16 %v447
        %v487 = vunpack.c.l.b16 %v448
        %v488 = vpack.c.b16 %v473, %v472
        %v489 = vpack.c.b16 %v475, %v474
        %v490 = vpack.c.b16 %v477, %v476
        %v491 = vpack.c.b16 %v479, %v478
        %v492 = vpack.c.b16 %v481, %v480
        %v493 = vpack.c.b16 %v483, %v482
        %v494 = vpack.c.b16 %v485, %v484
        %v495 = vpack.c.b16 %v487, %v486
        %504 = vmatprep.subr.bf16.mxu0 0
        %505 = vmatpush1.bf16.msra.mxu0 %v495
        %506 = vmatprep.subr.bf16.mxu0 0
        %507 = vmatpush1.bf16.msra.mxu0 %v494
        %508 = vmatprep.subr.bf16.mxu0 0
        %509 = vmatpush1.bf16.msra.mxu0 %v493
        %510 = vmatprep.subr.bf16.mxu0 0
        %511 = vmatpush1.bf16.msra.mxu0 %v492
        %512 = vmatprep.subr.bf16.mxu0 0
        %513 = vmatpush1.bf16.msra.mxu0 %v491
        %514 = vmatprep.subr.bf16.mxu0 0
        %515 = vmatpush1.bf16.msra.mxu0 %v490
        %516 = vmatprep.subr.bf16.mxu0 0
        %517 = vmatpush1.bf16.msra.mxu0 %v489
        %518 = vmatprep.subr.bf16.mxu0 0
        %519 = vmatpush1.bf16.msra.mxu0 %v488
        %520 = vmatprep.subr.bf16.mxu0 0
        %521 = vmatpush2.bf16.msra.mxu0 0
        %522 = vmatprep.subr.bf16.mxu0 0
        %523 = vmatpush2.bf16.msra.mxu0 0
        %524 = vmatprep.subr.bf16.mxu0 0
        %525 = vmatpush2.bf16.msra.mxu0 0
        %526 = vmatprep.subr.bf16.mxu0 0
        %527 = vmatpush2.bf16.msra.mxu0 0
        %528 = vmatprep.subr.bf16.mxu0 0
        %529 = vmatpush2.bf16.msra.mxu0 0
        %530 = vmatprep.subr.bf16.mxu0 0
        %531 = vmatpush2.bf16.msra.mxu0 0
        %532 = vmatprep.subr.bf16.mxu0 0
        %533 = vmatpush2.bf16.msra.mxu0 0
        %534 = vmatprep.subr.bf16.mxu0 0
        %535 = vmatpush2.bf16.msra.mxu0 0
        %536 = vmatprep.mubr.bf16.mxu0 0
        %537 = vmatmul.mubr.bf16.gmra.mxu0 %v432
        %v538 = vpop.f32.mrf.mxu0
        %v539 = vadd.f32 %v454, %v538
        %v540 = vpop.f32.mrf.mxu0
        %v541 = vpop.f32.mrf.mxu0
        %v542 = vpop.f32.mrf.mxu0
        %543 = vdwg.mxu0
        %v544 = vld [vmem:[#allocation7] sm:$0xf]
        %v545 = vld [vmem:[#allocation7 + $0x4] sm:$0xf]
        %v546 = vld [vmem:[#allocation7 + $0x8] sm:$0xf]
        %v547 = vld [vmem:[#allocation7 + $0xc] sm:$0xf]
        %v548 = vld [vmem:[#allocation7 + $0x10] sm:$0xf]
        %v549 = vld [vmem:[#allocation7 + $0x14] sm:$0xf]
        %v550 = vld [vmem:[#allocation7 + $0x18] sm:$0xf]
        %v551 = vld [vmem:[#allocation7 + $0x1c] sm:$0xf]
        %v552 = vld [vmem:[#allocation7 + $0x20] sm:$0xf]
        %v553 = vld [vmem:[#allocation7 + $0x24] sm:$0xf]
        %v554 = vld [vmem:[#allocation7 + $0x28] sm:$0xf]
        %v555 = vld [vmem:[#allocation7 + $0x2c] sm:$0xf]
        %v556 = vld [vmem:[#allocation7 + $0x30] sm:$0xf]
        %v557 = vld [vmem:[#allocation7 + $0x34] sm:$0xf]
        %v558 = vld [vmem:[#allocation7 + $0x38] sm:$0xf]
        %v559 = vld [vmem:[#allocation7 + $0x3c] sm:$0xf]
        %v560 = vld [vmem:[%s4] sm:$0x1]
        %v562 = vlaneseq
        %v563 = vshrl.u32 %v562, 7
        %v564 = vsub.s32 0, %v563
        %v565 = vrot.slane %v560, %v564
        %v583 = vunpack.c.l.b16 %v544
        %v584 = vunpack.c.l.b16 %v545
        %v585 = vunpack.c.l.b16 %v546
        %v586 = vunpack.c.l.b16 %v547
        %v587 = vunpack.c.l.b16 %v548
        %v588 = vunpack.c.l.b16 %v549
        %v589 = vunpack.c.l.b16 %v550
        %v590 = vunpack.c.l.b16 %v551
        %v591 = vunpack.c.l.b16 %v552
        %v592 = vunpack.c.l.b16 %v553
        %v593 = vunpack.c.l.b16 %v554
        %v594 = vunpack.c.l.b16 %v555
        %v595 = vunpack.c.l.b16 %v556
        %v596 = vunpack.c.l.b16 %v557
        %v597 = vunpack.c.l.b16 %v558
        %v598 = vunpack.c.l.b16 %v559
        %v599 = vpack.c.b16 %v584, %v583
        %v600 = vpack.c.b16 %v586, %v585
        %v601 = vpack.c.b16 %v588, %v587
        %v602 = vpack.c.b16 %v590, %v589
        %v603 = vpack.c.b16 %v592, %v591
        %v604 = vpack.c.b16 %v594, %v593
        %v605 = vpack.c.b16 %v596, %v595
        %v606 = vpack.c.b16 %v598, %v597
        %615 = vmatprep.subr.bf16.mxu0 0
        %616 = vmatpush1.bf16.msra.mxu0 %v606
        %617 = vmatprep.subr.bf16.mxu0 0
        %618 = vmatpush1.bf16.msra.mxu0 %v605
        %619 = vmatprep.subr.bf16.mxu0 0
        %620 = vmatpush1.bf16.msra.mxu0 %v604
        %621 = vmatprep.subr.bf16.mxu0 0
        %622 = vmatpush1.bf16.msra.mxu0 %v603
        %623 = vmatprep.subr.bf16.mxu0 0
        %624 = vmatpush1.bf16.msra.mxu0 %v602
        %625 = vmatprep.subr.bf16.mxu0 0
        %626 = vmatpush1.bf16.msra.mxu0 %v601
        %627 = vmatprep.subr.bf16.mxu0 0
        %628 = vmatpush1.bf16.msra.mxu0 %v600
        %629 = vmatprep.subr.bf16.mxu0 0
        %630 = vmatpush1.bf16.msra.mxu0 %v599
        %631 = vmatprep.subr.bf16.mxu0 0
        %632 = vmatpush2.bf16.msra.mxu0 0
        %633 = vmatprep.subr.bf16.mxu0 0
        %634 = vmatpush2.bf16.msra.mxu0 0
        %635 = vmatprep.subr.bf16.mxu0 0
        %636 = vmatpush2.bf16.msra.mxu0 0
        %637 = vmatprep.subr.bf16.mxu0 0
        %638 = vmatpush2.bf16.msra.mxu0 0
        %639 = vmatprep.subr.bf16.mxu0 0
        %640 = vmatpush2.bf16.msra.mxu0 0
        %641 = vmatprep.subr.bf16.mxu0 0
        %642 = vmatpush2.bf16.msra.mxu0 0
        %643 = vmatprep.subr.bf16.mxu0 0
        %644 = vmatpush2.bf16.msra.mxu0 0
        %645 = vmatprep.subr.bf16.mxu0 0
        %646 = vmatpush2.bf16.msra.mxu0 0
        %647 = vmatprep.mubr.bf16.mxu0 0
        %648 = vmatmul.mubr.bf16.gmra.mxu0 %v432
        %v649 = vpop.f32.mrf.mxu0
        %v650 = vadd.f32 %v565, %v649
        %v651 = vpop.f32.mrf.mxu0
        %v652 = vpop.f32.mrf.mxu0
        %v653 = vpop.f32.mrf.mxu0
        %654 = vdwg.mxu0
        %v655 = vld [vmem:[#allocation8] sm:$0xf]
        %v656 = vld [vmem:[#allocation8 + $0x4] sm:$0xf]
        %v657 = vld [vmem:[#allocation8 + $0x8] sm:$0xf]
        %v658 = vld [vmem:[#allocation8 + $0xc] sm:$0xf]
        %v659 = vld [vmem:[#allocation8 + $0x10] sm:$0xf]
        %v660 = vld [vmem:[#allocation8 + $0x14] sm:$0xf]
        %v661 = vld [vmem:[#allocation8 + $0x18] sm:$0xf]
        %v662 = vld [vmem:[#allocation8 + $0x1c] sm:$0xf]
        %v663 = vld [vmem:[#allocation8 + $0x20] sm:$0xf]
        %v664 = vld [vmem:[#allocation8 + $0x24] sm:$0xf]
        %v665 = vld [vmem:[#allocation8 + $0x28] sm:$0xf]
        %v666 = vld [vmem:[#allocation8 + $0x2c] sm:$0xf]
        %v667 = vld [vmem:[#allocation8 + $0x30] sm:$0xf]
        %v668 = vld [vmem:[#allocation8 + $0x34] sm:$0xf]
        %v669 = vld [vmem:[#allocation8 + $0x38] sm:$0xf]
        %v670 = vld [vmem:[#allocation8 + $0x3c] sm:$0xf]
        %v671 = vld [vmem:[%s6] sm:$0x1]
        %v673 = vlaneseq
        %v674 = vshrl.u32 %v673, 7
        %v675 = vsub.s32 0, %v674
        %v676 = vrot.slane %v671, %v675
        %v694 = vunpack.c.l.b16 %v655
        %v695 = vunpack.c.l.b16 %v656
        %v696 = vunpack.c.l.b16 %v657
        %v697 = vunpack.c.l.b16 %v658
        %v698 = vunpack.c.l.b16 %v659
        %v699 = vunpack.c.l.b16 %v660
        %v700 = vunpack.c.l.b16 %v661
        %v701 = vunpack.c.l.b16 %v662
        %v702 = vunpack.c.l.b16 %v663
        %v703 = vunpack.c.l.b16 %v664
        %v704 = vunpack.c.l.b16 %v665
        %v705 = vunpack.c.l.b16 %v666
        %v706 = vunpack.c.l.b16 %v667
        %v707 = vunpack.c.l.b16 %v668
        %v708 = vunpack.c.l.b16 %v669
        %v709 = vunpack.c.l.b16 %v670
        %v710 = vpack.c.b16 %v695, %v694
        %v711 = vpack.c.b16 %v697, %v696
        %v712 = vpack.c.b16 %v699, %v698
        %v713 = vpack.c.b16 %v701, %v700
        %v714 = vpack.c.b16 %v703, %v702
        %v715 = vpack.c.b16 %v705, %v704
        %v716 = vpack.c.b16 %v707, %v706
        %v717 = vpack.c.b16 %v709, %v708
        %726 = vmatprep.subr.bf16.mxu0 0
        %727 = vmatpush1.bf16.msra.mxu0 %v717
        %728 = vmatprep.subr.bf16.mxu0 0
        %729 = vmatpush1.bf16.msra.mxu0 %v716
        %730 = vmatprep.subr.bf16.mxu0 0
        %731 = vmatpush1.bf16.msra.mxu0 %v715
        %732 = vmatprep.subr.bf16.mxu0 0
        %733 = vmatpush1.bf16.msra.mxu0 %v714
        %734 = vmatprep.subr.bf16.mxu0 0
        %735 = vmatpush1.bf16.msra.mxu0 %v713
        %736 = vmatprep.subr.bf16.mxu0 0
        %737 = vmatpush1.bf16.msra.mxu0 %v712
        %738 = vmatprep.subr.bf16.mxu0 0
        %739 = vmatpush1.bf16.msra.mxu0 %v711
        %740 = vmatprep.subr.bf16.mxu0 0
        %741 = vmatpush1.bf16.msra.mxu0 %v710
        %742 = vmatprep.subr.bf16.mxu0 0
        %743 = vmatpush2.bf16.msra.mxu0 0
        %744 = vmatprep.subr.bf16.mxu0 0
        %745 = vmatpush2.bf16.msra.mxu0 0
        %746 = vmatprep.subr.bf16.mxu0 0
        %747 = vmatpush2.bf16.msra.mxu0 0
        %748 = vmatprep.subr.bf16.mxu0 0
        %749 = vmatpush2.bf16.msra.mxu0 0
        %750 = vmatprep.subr.bf16.mxu0 0
        %751 = vmatpush2.bf16.msra.mxu0 0
        %752 = vmatprep.subr.bf16.mxu0 0
        %753 = vmatpush2.bf16.msra.mxu0 0
        %754 = vmatprep.subr.bf16.mxu0 0
        %755 = vmatpush2.bf16.msra.mxu0 0
        %756 = vmatprep.subr.bf16.mxu0 0
        %757 = vmatpush2.bf16.msra.mxu0 0
        %758 = vmatprep.mubr.bf16.mxu0 0
        %759 = vmatmul.mubr.bf16.gmra.mxu0 %v432
        %v760 = vpop.f32.mrf.mxu0
        %v761 = vadd.f32 %v676, %v760
        %v762 = vpop.f32.mrf.mxu0
        %v763 = vpop.f32.mrf.mxu0
        %v764 = vpop.f32.mrf.mxu0
        %765 = vdwg.mxu0
        %v766 = vmul.f32 %v539, 0.17677669
        %v767 = vpack.c.bf16 %v766, %v766
        %768 = vst [vmem:[%s416] sm:$0xf] %v767
        %v769 = vpack.c.bf16 %v650, %v650
        %770 = vst [vmem:[%s423] sm:$0xf] %v769
        %v771 = vpack.c.bf16 %v761, %v761
        %772 = vst [vmem:[%s430] sm:$0xf] %v771
        %s773 = sand.u32 %s208, 1
        %s774 = scalar_lea.sflag [#allocation4], %s773
        %s775 = sand.u32 %s208, 1
        %s776 = smul.addr %s775, 4
        %s777 = scalar_lea.vmem [#allocation10], %s776
        %s778 = sand.u32 %s32, 1
        %s779 = scalar_lea.sflag [#allocation12], %s778
        %s780 = sand.u32 %s236, 1
        %s781 = smul.addr %s780, 4
        %s782 = scalar_lea.vmem [#allocation11], %s781
        %s783 = sand.u32 %s32, 1
        %s784 = scalar_lea.sflag [#allocation12], %s783
        %s785 = sand.u32 %s264, 1
        %s786 = smul.addr %s785, 4
        %s787 = scalar_lea.vmem [#allocation13], %s786
        // Predicated region
        $region65: #{tpu_custom_call.1} parent=47 // pred_check
          %p788 = pneg %p218
        $region66: #{tpu_custom_call.1} parent=47 // pred_check_branch
          %790 = sbr.rel (%p788) target = $region68
        $region67: #{tpu_custom_call.1} parent=47 // pred_region
          %s792 = ssub.s32 64, 64
          %793 = vsyncadd %s774, %s792
          %s794 = sadd.s32 %s37, %s36
          %s795 = smul.addr %s794, 64
          %s796 = scalar_lea.hbm %s7, %s795
          %s798 = sshll.u32 %s777, 4
          %s799 = int_to_ptr.vmem [resolvable:$true] %s798
          %801 = dma.vmem_to_hbm [thread:$0]  %s799, 64, %s796, %s774
        $region68: #{tpu_custom_call.1} parent=47 // pred_fallthru
          _
        // Predicated region
        $region69: #{tpu_custom_call.1} parent=47 // pred_check
          %p802 = pneg %p246
        $region70: #{tpu_custom_call.1} parent=47 // pred_check_branch
          %804 = sbr.rel (%p802) target = $region72
        $region71: #{tpu_custom_call.1} parent=47 // pred_region
          %s806 = ssub.s32 64, 64
          %807 = vsyncadd %s779, %s806
          %s808 = sadd.s32 %s37, %s36
          %s809 = smul.addr %s808, 64
          %s810 = scalar_lea.hbm %s8, %s809
          %s812 = sshll.u32 %s782, 4
          %s813 = int_to_ptr.vmem [resolvable:$true] %s812
          %815 = dma.vmem_to_hbm [thread:$0]  %s813, 64, %s810, %s779
        $region72: #{tpu_custom_call.1} parent=47 // pred_fallthru
          _
        // Predicated region
        $region73: #{tpu_custom_call.1} parent=47 // pred_check
          %p816 = pneg %p274
        $region74: #{tpu_custom_call.1} parent=47 // pred_check_branch
          %818 = sbr.rel (%p816) target = $region76
        $region75: #{tpu_custom_call.1} parent=47 // pred_region
          %s820 = ssub.s32 64, 64
          %821 = vsyncadd %s784, %s820
          %s822 = sadd.s32 %s37, %s36
          %s823 = smul.addr %s822, 64
          %s824 = scalar_lea.hbm %s9, %s823
          %s826 = sshll.u32 %s787, 4
          %s827 = int_to_ptr.vmem [resolvable:$true] %s826
          %829 = dma.vmem_to_hbm [thread:$0]  %s827, 64, %s824, %s784
        $region76: #{tpu_custom_call.1} parent=47 // pred_fallthru
          _
      $region48: #{tpu_custom_call.1} parent=5 // pred_fallthru
        _
      %p830 = scmp.le.s32.totalorder 2, %s27
      // Predicated region
      $region77: #{tpu_custom_call.1} parent=5 // pred_check
        %p831 = pneg %p830
      $region78: #{tpu_custom_call.1} parent=5 // pred_check_branch
        %833 = sbr.rel (%p831) target = $region80
      $region79: #{tpu_custom_call.1} parent=5 // pred_region
        %s834 = ssub.s32 %s27, 2
        // Predicated region
        $region81: #{tpu_custom_call.1} parent=79 // pred_check
          %p835 = pneg %p224
        $region82: #{tpu_custom_call.1} parent=79 // pred_check_branch
          %837 = sbr.rel (%p835) target = $region84
        $region83: #{tpu_custom_call.1} parent=79 // pred_region
          %s838 = sand.u32 %s209, 1
          %s839 = scalar_lea.sflag [#allocation4], %s838
          %s840 = sand.u32 %s209, 1
          %s841 = smul.addr %s840, 4
          %s842 = scalar_lea.vmem [#allocation10], %s841
          %843 = dma.done %s839, 64
        $region84: #{tpu_custom_call.1} parent=79 // pred_fallthru
          _
        // Predicated region
        $region85: #{tpu_custom_call.1} parent=79 // pred_check
          %p844 = pneg %p252
        $region86: #{tpu_custom_call.1} parent=79 // pred_check_branch
          %846 = sbr.rel (%p844) target = $region88
        $region87: #{tpu_custom_call.1} parent=79 // pred_region
          %s847 = sand.u32 %s33, 1
          %s848 = scalar_lea.sflag [#allocation12], %s847
          %s849 = sand.u32 %s237, 1
          %s850 = smul.addr %s849, 4
          %s851 = scalar_lea.vmem [#allocation11], %s850
          %852 = dma.done %s848, 64
        $region88: #{tpu_custom_call.1} parent=79 // pred_fallthru
          _
        // Predicated region
        $region89: #{tpu_custom_call.1} parent=79 // pred_check
          %p853 = pneg %p280
        $region90: #{tpu_custom_call.1} parent=79 // pred_check_branch
          %855 = sbr.rel (%p853) target = $region92
        $region91: #{tpu_custom_call.1} parent=79 // pred_region
          %s856 = sand.u32 %s33, 1
          %s857 = scalar_lea.sflag [#allocation12], %s856
          %s858 = sand.u32 %s265, 1
          %s859 = smul.addr %s858, 4
          %s860 = scalar_lea.vmem [#allocation13], %s859
          %861 = dma.done %s857, 64
        $region92: #{tpu_custom_call.1} parent=79 // pred_fallthru
          _
      $region80: #{tpu_custom_call.1} parent=5 // pred_fallthru
        _
    $region6: #{tpu_custom_call.1} parent=1 // loop_footer
      %s31 = sadd.s32 1, %s27
    $region7: #{tpu_custom_call.1} parent=1 // loop_footer_branch
      %26 = sbr.rel target = $region3
    $region8: #{tpu_custom_call.1} parent=1 // loop_exit
      _
    %862 = vsyncpa [#allocation3], 1
    %s863 = scalar_lea.sflag [#allocation3], 1
    %864 = vsyncpa %s863, 1
    %865 = vsyncpa [#allocation6], 1
    %866 = vsyncpa [#allocation9], 1
    %867 = vsyncpa [#allocation4], 1
    %s868 = scalar_lea.sflag [#allocation4], 1
    %869 = vsyncpa %s868, 1
    %870 = vsyncpa [#allocation12], 1
    %s871 = scalar_lea.sflag [#allocation12], 1
    %872 = vsyncpa %s871, 1

</llo_original>
